<compile_context>
chip_gen: v5e
topology: v5e:2x2
jax: 0.10.0
libtpu: 0.0.40
codegen_flags: <defaults>
</compile_context>

<pallas_src>
import functools

import jax
import jax.numpy as jnp
from jax.experimental import pallas as pl
from jax.experimental.pallas import tpu as pltpu


def _round_up(x, m):
    return (x + m - 1) // m * m


def _cdiv(a, b):
    return -(-a // b)


# ----------------------------------------------------------------------------
# Pallas kernel: fused (im2col-matmul) Conv2d + GDN + PReLU for one M-tile.
# ----------------------------------------------------------------------------
def _conv_gdn_prelu_kernel(p_ref, w_ref, g_ref, b_ref, a_ref, o_ref):
    # Conv as matmul: bf16 inputs, f32 accumulation on the MXU.
    z = jnp.dot(p_ref[...], w_ref[...], preferred_element_type=jnp.float32)
    # GDN: norm_i = beta_i + sum_j gamma[j, i] * z_j^2  (1x1 conv over channels),
    # bf16 MXU feed with f32 accumulation.
    zsq = (z * z).astype(jnp.bfloat16)
    norm = jnp.dot(zsq, g_ref[...], preferred_element_type=jnp.float32) + b_ref[...]
    z = z * jax.lax.rsqrt(norm)              # EUP rsqrt instead of sqrt + divide
    a = a_ref[0, 0]                          # PReLU slope (scalar from SMEM)
    z = jnp.where(z >= 0.0, z, a * z)
    o_ref[...] = z.astype(o_ref.dtype)       # bf16 for blocks 1-2, f32 for block 3


def _run_conv_block(patches, w, gamma, beta, alpha11, tile_m, out_dtype):
    m_pad, K = patches.shape
    cout = w.shape[1]
    grid = (m_pad // tile_m,)

    out_bytes = jnp.dtype(out_dtype).itemsize
    flops = 2 * m_pad * (K + cout) * cout + 4 * m_pad * cout
    bytes_accessed = (m_pad * K * 2 + K * cout * 2 + cout * cout * 2
                      + cout * 4 + m_pad * cout * out_bytes)

    return pl.pallas_call(
        _conv_gdn_prelu_kernel,
        out_shape=jax.ShapeDtypeStruct((m_pad, cout), out_dtype),
        grid=grid,
        in_specs=[
            pl.BlockSpec((tile_m, K), lambda i: (i, 0)),     # patches tile (bf16 stream)
            pl.BlockSpec((K, cout), lambda i: (0, 0)),       # conv weight (resident, bf16)
            pl.BlockSpec((cout, cout), lambda i: (0, 0)),    # GDN gamma (resident, bf16)
            pl.BlockSpec((1, cout), lambda i: (0, 0)),       # GDN beta (f32)
            pl.BlockSpec(memory_space=pltpu.MemorySpace.SMEM),  # PReLU slope scalar
        ],
        out_specs=pl.BlockSpec((tile_m, cout), lambda i: (i, 0)),
        compiler_params=pltpu.CompilerParams(
            dimension_semantics=("parallel",),               # megacore split on v7x
            vmem_limit_bytes=32 * 1024 * 1024,
        ),
        cost_estimate=pl.CostEstimate(flops=flops,
                                      transcendentals=m_pad * cout,
                                      bytes_accessed=bytes_accessed),
    )(patches, w, gamma, beta, alpha11)


# ----------------------------------------------------------------------------
# Plain-JAX glue: im2col and parameter preprocessing.
# ----------------------------------------------------------------------------
def _im2col(x_nhwc, kh, kw, stride, pad):
    # TODO(synk): extract patches inside the kernel from an NHWC halo tile to
    # remove the kh*kw im2col HBM read expansion for large images.
    x = x_nhwc.astype(jnp.bfloat16)           # cast before materializing patches
    B, H, W, C = x.shape
    if pad:
        x = jnp.pad(x, ((0, 0), (pad, pad), (pad, pad), (0, 0)))
    Hp, Wp = H + 2 * pad, W + 2 * pad
    Ho = (Hp - kh) // stride + 1
    Wo = (Wp - kw) // stride + 1
    cols = []
    for di in range(kh):
        for dj in range(kw):
            cols.append(x[:, di:di + stride * (Ho - 1) + 1:stride,
                          dj:dj + stride * (Wo - 1) + 1:stride, :])
    patches = jnp.stack(cols, axis=3)         # (B, Ho, Wo, kh*kw, C), bf16
    return patches.reshape(B * Ho * Wo, kh * kw * C), (B, Ho, Wo)


def _choose_tile_m(M):
    """Tile over im2col rows: multiple of 16 (bf16 sublane pack), >= 2 grid steps
    whenever possible (v7x megacore gets both TensorCores), and up to 2048 rows for
    large M to amortize the ~0.35us per-grid-step overhead (VMEM use stays tiny)."""
    if M <= 16:
        return 16
    half = _cdiv(M, 2)
    if half <= 256:
        return _round_up(half, 16)
    return min(2048, _round_up(half, 256))


def conv_block_fwd(x_nhwc, blk, cfg):
    kh = kw = cfg["k"]
    stride, pad, cout = cfg["stride"], cfg["pad"], cfg["cout"]
    patches, (B, Ho, Wo) = _im2col(x_nhwc, kh, kw, stride, pad)
    M, K = patches.shape
    tile_m = _choose_tile_m(M)
    m_pad = _round_up(M, tile_m)
    if m_pad != M:
        patches = jnp.pad(patches, ((0, m_pad - M), (0, 0)))   # single fused pad
    out = _run_conv_block(patches, blk["w"], blk["gamma"], blk["beta"], blk["alpha"],
                          tile_m, cfg["out_dtype"])
    return out[:M].reshape(B, Ho, Wo, cout)


def init_params(key, enc_shape, kernel_sz, Nc_conv):
    enc_N = enc_shape[0]
    k = kernel_sz
    shapes = {"conv1_w": (Nc_conv, 3, k, k),
              "conv2_w": (Nc_conv, Nc_conv, k, k),
              "conv3_w": (enc_N, Nc_conv, k, k)}
    params = {}
    names = sorted(shapes)
    for kk, name in zip(jax.random.split(key, len(names)), names):
        params[name] = 0.1 * jax.random.normal(kk, shapes[name], jnp.float32)
    for gname, c in (("gdn1", Nc_conv), ("gdn2", Nc_conv), ("gdn3", enc_N)):
        params[gname + "_g"] = 0.1 * jnp.eye(c, dtype=jnp.float32)   # GDN gamma init
        params[gname + "_b"] = jnp.ones((c,), jnp.float32)           # GDN beta init
    for aname in ("prelu1", "prelu2", "prelu3"):
        params[aname] = jnp.float32(0.25)                            # nn.PReLU() default
    return params


def prepare_params(params, kernel_sz):
    """One-time weight transforms (hoisted out of the per-step forward).

    Returns (prep, cfg): prep holds arrays only (safe to pass through jit),
    cfg holds static Python ints / dtypes (closed over, never traced)."""
    pad = (kernel_sz - 1) // 2
    strides = {"conv1": 2, "conv2": 2, "conv3": 1}
    prep, cfg = {}, {}
    for i, name in enumerate(("conv1", "conv2", "conv3"), start=1):
        w = params[name + "_w"]                               # (Cout, Cin, kh, kw)
        cout, cin, kh, kw = w.shape
        K = kh * kw * cin
        # OIHW -> (kh, kw, Cin, Cout) -> (K, Cout): matches im2col feature order.
        w_mat = jnp.transpose(w, (2, 3, 1, 0)).reshape(K, cout).astype(jnp.bfloat16)
        gamma = params[f"gdn{i}_g"].astype(jnp.bfloat16)      # bf16 MXU feed
        beta = params[f"gdn{i}_b"].reshape(1, cout).astype(jnp.float32)
        alpha = jnp.reshape(params[f"prelu{i}"], (1, 1)).astype(jnp.float32)
        prep[name] = dict(w=w_mat, gamma=gamma, beta=beta, alpha=alpha)
        cfg[name] = dict(k=kh, stride=strides[name], pad=pad, cout=int(cout),
                         out_dtype=jnp.float32 if i == 3 else jnp.bfloat16)
    return prep, cfg


def encoder_forward(prep, x_nchw, cfg):
    x = jnp.transpose(x_nchw, (0, 2, 3, 1))            # NCHW -> NHWC
    out = conv_block_fwd(x, prep["conv1"], cfg["conv1"])     # stride 2
    out = conv_block_fwd(out, prep["conv2"], cfg["conv2"])   # stride 2
    out = conv_block_fwd(out, prep["conv3"], cfg["conv3"])   # stride 1
    B = out.shape[0]
    # nn.Flatten() on the NCHW tensor.
    return jnp.transpose(out, (0, 3, 1, 2)).reshape(B, -1)


# ----------------------------------------------------------------------------
if __name__ == "__main__":
    B, H, W = 2, 16, 16
    kernel_sz, Nc_conv = 3, 8
    enc_shape = (4, 4, 4)      # 16 --(s2)--> 8 --(s2)--> 4 --(s1)--> 4

    key = jax.random.PRNGKey(0)
    k_params, k_x, k_x2 = jax.random.split(key, 3)
    params = init_params(k_params, enc_shape, kernel_sz, Nc_conv)
    prep, cfg = prepare_params(params, kernel_sz)

    # Static config is closed over (not traced); only arrays flow through jit.
    fwd = jax.jit(functools.partial(encoder_forward, cfg=cfg))

    x = jax.random.uniform(k_x, (B, 3, H, W), jnp.float32)
    out = jax.block_until_ready(fwd(prep, x))
    assert out.shape == (B, enc_shape[0] * enc_shape[1] * enc_shape[2]), out.shape
    assert bool(jnp.all(jnp.isfinite(out)))

    # Larger spatial input exercises the multi-step grid / pipelined path.
    x2 = jax.random.uniform(k_x2, (B, 3, 64, 64), jnp.float32)
    out2 = jax.block_until_ready(fwd(prep, x2))
    assert out2.shape == (B, enc_shape[0] * 16 * 16), out2.shape
    assert bool(jnp.all(jnp.isfinite(out2)))

    print("KERNEL_OK")
</pallas_src>

<mosaic_0001>
module attributes {stable_mosaic.version = 11 : i64} {
  func.func @_conv_gdn_prelu_kernel(%arg0: i32, %arg1: memref<64x27xbf16, #tpu.memory_space<vmem>>, %arg2: memref<27x8xbf16, #tpu.memory_space<vmem>>, %arg3: memref<8x8xbf16, #tpu.memory_space<vmem>>, %arg4: memref<1x8xf32, #tpu.memory_space<vmem>>, %arg5: memref<1x1xf32, #tpu.memory_space<smem>>, %arg6: memref<64x8xbf16, #tpu.memory_space<vmem>>) attributes {dimension_semantics = [#tpu.dimension_semantics<parallel>], iteration_bounds = array<i64: 2>, scalar_prefetch = 0 : i64, scratch_operands = 0 : i64, tpu.core_type = #tpu.core_type<tc>, window_params = [{transform_indices = @transform_0, window_bounds = array<i64: 64, 27>}, {pipeline_mode = #tpu.pipeline_mode<synchronous>, transform_indices = @transform_1, window_bounds = array<i64: 27, 8>}, {pipeline_mode = #tpu.pipeline_mode<synchronous>, transform_indices = @transform_2, window_bounds = array<i64: 8, 8>}, {pipeline_mode = #tpu.pipeline_mode<synchronous>, transform_indices = @transform_3, window_bounds = array<i64: 1, 8>}, {transform_indices = @transform_4, window_bounds = array<i64: 1, 1>}, {transform_indices = @transform_5, window_bounds = array<i64: 64, 8>}]} {
    %c0 = arith.constant 0 : index
    %c0_0 = arith.constant 0 : index
    %0 = vector.load %arg1[%c0, %c0_0] : memref<64x27xbf16, #tpu.memory_space<vmem>>, vector<64x27xbf16>
    %c0_1 = arith.constant 0 : index
    %c0_2 = arith.constant 0 : index
    %1 = vector.load %arg2[%c0_1, %c0_2] : memref<27x8xbf16, #tpu.memory_space<vmem>>, vector<27x8xbf16>
    %cst = arith.constant dense<0.000000e+00> : vector<64x8xf32>
    %2 = tpu.matmul %0, %1, %cst {dimension_numbers = #tpu.dot_dimension_numbers<[1], [0], [0], [1], [0, 0, 1, 1], [], []>} : vector<64x27xbf16>, vector<27x8xbf16>, vector<64x8xf32> -> vector<64x8xf32>
    %3 = arith.mulf %2, %2 : vector<64x8xf32>
    %4 = arith.truncf %3 : vector<64x8xf32> to vector<64x8xbf16>
    %c0_3 = arith.constant 0 : index
    %c0_4 = arith.constant 0 : index
    %5 = vector.load %arg3[%c0_3, %c0_4] : memref<8x8xbf16, #tpu.memory_space<vmem>>, vector<8x8xbf16>
    %cst_5 = arith.constant dense<0.000000e+00> : vector<64x8xf32>
    %6 = tpu.matmul %4, %5, %cst_5 {dimension_numbers = #tpu.dot_dimension_numbers<[1], [0], [0], [1], [0, 0, 1, 1], [], []>} : vector<64x8xbf16>, vector<8x8xbf16>, vector<64x8xf32> -> vector<64x8xf32>
    %c0_6 = arith.constant 0 : index
    %c0_7 = arith.constant 0 : index
    %7 = vector.load %arg4[%c0_6, %c0_7] : memref<1x8xf32, #tpu.memory_space<vmem>>, vector<1x8xf32>
    %8 = vector.broadcast %7 : vector<1x8xf32> to vector<64x8xf32>
    %9 = arith.addf %6, %8 : vector<64x8xf32>
    %10 = math.rsqrt %9 : vector<64x8xf32>
    %11 = arith.mulf %2, %10 : vector<64x8xf32>
    %c0_8 = arith.constant 0 : index
    %c0_9 = arith.constant 0 : index
    %12 = memref.load %arg5[%c0_8, %c0_9] : memref<1x1xf32, #tpu.memory_space<smem>>
    %cst_10 = arith.constant 0.000000e+00 : f32
    %13 = vector.broadcast %cst_10 : f32 to vector<64x8xf32>
    %14 = arith.cmpf oge, %11, %13 : vector<64x8xf32>
    %15 = vector.broadcast %12 : f32 to vector<64x8xf32>
    %16 = arith.mulf %15, %11 : vector<64x8xf32>
    %17 = arith.select %14, %11, %16 : vector<64x8xi1>, vector<64x8xf32>
    %18 = arith.truncf %17 : vector<64x8xf32> to vector<64x8xbf16>
    %c0_11 = arith.constant 0 : index
    %c0_12 = arith.constant 0 : index
    %19 = vector.load %arg6[%c0_11, %c0_12] : memref<64x8xbf16, #tpu.memory_space<vmem>>, vector<64x8xbf16>
    tpu.vector_store %arg6[%c0_11, %c0_12], %18 {strides = array<i32>} : memref<64x8xbf16, #tpu.memory_space<vmem>>, vector<64x8xbf16>,
    return
  }
  func.func @transform_0(%arg0: i32) -> (i32, i32) {
    %c0_i32 = arith.constant 0 : i32
    %c0_i32_0 = arith.constant 0 : i32
    return %arg0, %c0_i32 : i32, i32
  }
  func.func @transform_1(%arg0: i32) -> (i32, i32) {
    %c0_i32 = arith.constant 0 : i32
    %c0_i32_0 = arith.constant 0 : i32
    %c0_i32_1 = arith.constant 0 : i32
    return %c0_i32, %c0_i32_0 : i32, i32
  }
  func.func @transform_2(%arg0: i32) -> (i32, i32) {
    %c0_i32 = arith.constant 0 : i32
    %c0_i32_0 = arith.constant 0 : i32
    %c0_i32_1 = arith.constant 0 : i32
    return %c0_i32, %c0_i32_0 : i32, i32
  }
  func.func @transform_3(%arg0: i32) -> (i32, i32) {
    %c0_i32 = arith.constant 0 : i32
    %c0_i32_0 = arith.constant 0 : i32
    %c0_i32_1 = arith.constant 0 : i32
    return %c0_i32, %c0_i32_0 : i32, i32
  }
  func.func @transform_4(%arg0: i32) -> (i32, i32) {
    %c0_i32 = arith.constant 0 : i32
    %c0_i32_0 = arith.constant 0 : i32
    %c0_i32_1 = arith.constant 0 : i32
    return %c0_i32, %c0_i32_0 : i32, i32
  }
  func.func @transform_5(%arg0: i32) -> (i32, i32) {
    %c0_i32 = arith.constant 0 : i32
    %c0_i32_0 = arith.constant 0 : i32
    return %arg0, %c0_i32 : i32, i32
  }
}

module attributes {stable_mosaic.version = 11 : i64} {
  func.func @_conv_gdn_prelu_kernel(%arg0: i32, %arg1: memref<16x72xbf16, #tpu.memory_space<vmem>>, %arg2: memref<72x8xbf16, #tpu.memory_space<vmem>>, %arg3: memref<8x8xbf16, #tpu.memory_space<vmem>>, %arg4: memref<1x8xf32, #tpu.memory_space<vmem>>, %arg5: memref<1x1xf32, #tpu.memory_space<smem>>, %arg6: memref<16x8xbf16, #tpu.memory_space<vmem>>) attributes {dimension_semantics = [#tpu.dimension_semantics<parallel>], iteration_bounds = array<i64: 2>, scalar_prefetch = 0 : i64, scratch_operands = 0 : i64, tpu.core_type = #tpu.core_type<tc>, window_params = [{transform_indices = @transform_0, window_bounds = array<i64: 16, 72>}, {pipeline_mode = #tpu.pipeline_mode<synchronous>, transform_indices = @transform_1, window_bounds = array<i64: 72, 8>}, {pipeline_mode = #tpu.pipeline_mode<synchronous>, transform_indices = @transform_2, window_bounds = array<i64: 8, 8>}, {pipeline_mode = #tpu.pipeline_mode<synchronous>, transform_indices = @transform_3, window_bounds = array<i64: 1, 8>}, {transform_indices = @transform_4, window_bounds = array<i64: 1, 1>}, {transform_indices = @transform_5, window_bounds = array<i64: 16, 8>}]} {
    %c0 = arith.constant 0 : index
    %c0_0 = arith.constant 0 : index
    %0 = vector.load %arg1[%c0, %c0_0] : memref<16x72xbf16, #tpu.memory_space<vmem>>, vector<16x72xbf16>
    %c0_1 = arith.constant 0 : index
    %c0_2 = arith.constant 0 : index
    %1 = vector.load %arg2[%c0_1, %c0_2] : memref<72x8xbf16, #tpu.memory_space<vmem>>, vector<72x8xbf16>
    %cst = arith.constant dense<0.000000e+00> : vector<16x8xf32>
    %2 = tpu.matmul %0, %1, %cst {dimension_numbers = #tpu.dot_dimension_numbers<[1], [0], [0], [1], [0, 0, 1, 1], [], []>} : vector<16x72xbf16>, vector<72x8xbf16>, vector<16x8xf32> -> vector<16x8xf32>
    %3 = arith.mulf %2, %2 : vector<16x8xf32>
    %4 = arith.truncf %3 : vector<16x8xf32> to vector<16x8xbf16>
    %c0_3 = arith.constant 0 : index
    %c0_4 = arith.constant 0 : index
    %5 = vector.load %arg3[%c0_3, %c0_4] : memref<8x8xbf16, #tpu.memory_space<vmem>>, vector<8x8xbf16>
    %cst_5 = arith.constant dense<0.000000e+00> : vector<16x8xf32>
    %6 = tpu.matmul %4, %5, %cst_5 {dimension_numbers = #tpu.dot_dimension_numbers<[1], [0], [0], [1], [0, 0, 1, 1], [], []>} : vector<16x8xbf16>, vector<8x8xbf16>, vector<16x8xf32> -> vector<16x8xf32>
    %c0_6 = arith.constant 0 : index
    %c0_7 = arith.constant 0 : index
    %7 = vector.load %arg4[%c0_6, %c0_7] : memref<1x8xf32, #tpu.memory_space<vmem>>, vector<1x8xf32>
    %8 = vector.broadcast %7 : vector<1x8xf32> to vector<16x8xf32>
    %9 = arith.addf %6, %8 : vector<16x8xf32>
    %10 = math.rsqrt %9 : vector<16x8xf32>
    %11 = arith.mulf %2, %10 : vector<16x8xf32>
    %c0_8 = arith.constant 0 : index
    %c0_9 = arith.constant 0 : index
    %12 = memref.load %arg5[%c0_8, %c0_9] : memref<1x1xf32, #tpu.memory_space<smem>>
    %cst_10 = arith.constant 0.000000e+00 : f32
    %13 = vector.broadcast %cst_10 : f32 to vector<16x8xf32>
    %14 = arith.cmpf oge, %11, %13 : vector<16x8xf32>
    %15 = vector.broadcast %12 : f32 to vector<16x8xf32>
    %16 = arith.mulf %15, %11 : vector<16x8xf32>
    %17 = arith.select %14, %11, %16 : vector<16x8xi1>, vector<16x8xf32>
    %18 = arith.truncf %17 : vector<16x8xf32> to vector<16x8xbf16>
    %c0_11 = arith.constant 0 : index
    %c0_12 = arith.constant 0 : index
    %19 = vector.load %arg6[%c0_11, %c0_12] : memref<16x8xbf16, #tpu.memory_space<vmem>>, vector<16x8xbf16>
    tpu.vector_store %arg6[%c0_11, %c0_12], %18 {strides = array<i32>} : memref<16x8xbf16, #tpu.memory_space<vmem>>, vector<16x8xbf16>,
    return
  }
  func.func @transform_0(%arg0: i32) -> (i32, i32) {
    %c0_i32 = arith.constant 0 : i32
    %c0_i32_0 = arith.constant 0 : i32
    return %arg0, %c0_i32 : i32, i32
  }
  func.func @transform_1(%arg0: i32) -> (i32, i32) {
    %c0_i32 = arith.constant 0 : i32
    %c0_i32_0 = arith.constant 0 : i32
    %c0_i32_1 = arith.constant 0 : i32
    return %c0_i32, %c0_i32_0 : i32, i32
  }
  func.func @transform_2(%arg0: i32) -> (i32, i32) {
    %c0_i32 = arith.constant 0 : i32
    %c0_i32_0 = arith.constant 0 : i32
    %c0_i32_1 = arith.constant 0 : i32
    return %c0_i32, %c0_i32_0 : i32, i32
  }
  func.func @transform_3(%arg0: i32) -> (i32, i32) {
    %c0_i32 = arith.constant 0 : i32
    %c0_i32_0 = arith.constant 0 : i32
    %c0_i32_1 = arith.constant 0 : i32
    return %c0_i32, %c0_i32_0 : i32, i32
  }
  func.func @transform_4(%arg0: i32) -> (i32, i32) {
    %c0_i32 = arith.constant 0 : i32
    %c0_i32_0 = arith.constant 0 : i32
    %c0_i32_1 = arith.constant 0 : i32
    return %c0_i32, %c0_i32_0 : i32, i32
  }
  func.func @transform_5(%arg0: i32) -> (i32, i32) {
    %c0_i32 = arith.constant 0 : i32
    %c0_i32_0 = arith.constant 0 : i32
    return %arg0, %c0_i32 : i32, i32
  }
}

module attributes {stable_mosaic.version = 11 : i64} {
  func.func @_conv_gdn_prelu_kernel(%arg0: i32, %arg1: memref<16x72xbf16, #tpu.memory_space<vmem>>, %arg2: memref<72x4xbf16, #tpu.memory_space<vmem>>, %arg3: memref<4x4xbf16, #tpu.memory_space<vmem>>, %arg4: memref<1x4xf32, #tpu.memory_space<vmem>>, %arg5: memref<1x1xf32, #tpu.memory_space<smem>>, %arg6: memref<16x4xf32, #tpu.memory_space<vmem>>) attributes {dimension_semantics = [#tpu.dimension_semantics<parallel>], iteration_bounds = array<i64: 2>, scalar_prefetch = 0 : i64, scratch_operands = 0 : i64, tpu.core_type = #tpu.core_type<tc>, window_params = [{transform_indices = @transform_0, window_bounds = array<i64: 16, 72>}, {pipeline_mode = #tpu.pipeline_mode<synchronous>, transform_indices = @transform_1, window_bounds = array<i64: 72, 4>}, {pipeline_mode = #tpu.pipeline_mode<synchronous>, transform_indices = @transform_2, window_bounds = array<i64: 4, 4>}, {pipeline_mode = #tpu.pipeline_mode<synchronous>, transform_indices = @transform_3, window_bounds = array<i64: 1, 4>}, {transform_indices = @transform_4, window_bounds = array<i64: 1, 1>}, {transform_indices = @transform_5, window_bounds = array<i64: 16, 4>}]} {
    %c0 = arith.constant 0 : index
    %c0_0 = arith.constant 0 : index
    %0 = vector.load %arg1[%c0, %c0_0] : memref<16x72xbf16, #tpu.memory_space<vmem>>, vector<16x72xbf16>
    %c0_1 = arith.constant 0 : index
    %c0_2 = arith.constant 0 : index
    %1 = vector.load %arg2[%c0_1, %c0_2] : memref<72x4xbf16, #tpu.memory_space<vmem>>, vector<72x4xbf16>
    %cst = arith.constant dense<0.000000e+00> : vector<16x4xf32>
    %2 = tpu.matmul %0, %1, %cst {dimension_numbers = #tpu.dot_dimension_numbers<[1], [0], [0], [1], [0, 0, 1, 1], [], []>} : vector<16x72xbf16>, vector<72x4xbf16>, vector<16x4xf32> -> vector<16x4xf32>
    %3 = arith.mulf %2, %2 : vector<16x4xf32>
    %4 = arith.truncf %3 : vector<16x4xf32> to vector<16x4xbf16>
    %c0_3 = arith.constant 0 : index
    %c0_4 = arith.constant 0 : index
    %5 = vector.load %arg3[%c0_3, %c0_4] : memref<4x4xbf16, #tpu.memory_space<vmem>>, vector<4x4xbf16>
    %cst_5 = arith.constant dense<0.000000e+00> : vector<16x4xf32>
    %6 = tpu.matmul %4, %5, %cst_5 {dimension_numbers = #tpu.dot_dimension_numbers<[1], [0], [0], [1], [0, 0, 1, 1], [], []>} : vector<16x4xbf16>, vector<4x4xbf16>, vector<16x4xf32> -> vector<16x4xf32>
    %c0_6 = arith.constant 0 : index
    %c0_7 = arith.constant 0 : index
    %7 = vector.load %arg4[%c0_6, %c0_7] : memref<1x4xf32, #tpu.memory_space<vmem>>, vector<1x4xf32>
    %8 = vector.broadcast %7 : vector<1x4xf32> to vector<16x4xf32>
    %9 = arith.addf %6, %8 : vector<16x4xf32>
    %10 = math.rsqrt %9 : vector<16x4xf32>
    %11 = arith.mulf %2, %10 : vector<16x4xf32>
    %c0_8 = arith.constant 0 : index
    %c0_9 = arith.constant 0 : index
    %12 = memref.load %arg5[%c0_8, %c0_9] : memref<1x1xf32, #tpu.memory_space<smem>>
    %cst_10 = arith.constant 0.000000e+00 : f32
    %13 = vector.broadcast %cst_10 : f32 to vector<16x4xf32>
    %14 = arith.cmpf oge, %11, %13 : vector<16x4xf32>
    %15 = vector.broadcast %12 : f32 to vector<16x4xf32>
    %16 = arith.mulf %15, %11 : vector<16x4xf32>
    %17 = arith.select %14, %11, %16 : vector<16x4xi1>, vector<16x4xf32>
    %c0_11 = arith.constant 0 : index
    %c0_12 = arith.constant 0 : index
    %18 = vector.load %arg6[%c0_11, %c0_12] : memref<16x4xf32, #tpu.memory_space<vmem>>, vector<16x4xf32>
    tpu.vector_store %arg6[%c0_11, %c0_12], %17 {strides = array<i32>} : memref<16x4xf32, #tpu.memory_space<vmem>>, vector<16x4xf32>,
    return
  }
  func.func @transform_0(%arg0: i32) -> (i32, i32) {
    %c0_i32 = arith.constant 0 : i32
    %c0_i32_0 = arith.constant 0 : i32
    return %arg0, %c0_i32 : i32, i32
  }
  func.func @transform_1(%arg0: i32) -> (i32, i32) {
    %c0_i32 = arith.constant 0 : i32
    %c0_i32_0 = arith.constant 0 : i32
    %c0_i32_1 = arith.constant 0 : i32
    return %c0_i32, %c0_i32_0 : i32, i32
  }
  func.func @transform_2(%arg0: i32) -> (i32, i32) {
    %c0_i32 = arith.constant 0 : i32
    %c0_i32_0 = arith.constant 0 : i32
    %c0_i32_1 = arith.constant 0 : i32
    return %c0_i32, %c0_i32_0 : i32, i32
  }
  func.func @transform_3(%arg0: i32) -> (i32, i32) {
    %c0_i32 = arith.constant 0 : i32
    %c0_i32_0 = arith.constant 0 : i32
    %c0_i32_1 = arith.constant 0 : i32
    return %c0_i32, %c0_i32_0 : i32, i32
  }
  func.func @transform_4(%arg0: i32) -> (i32, i32) {
    %c0_i32 = arith.constant 0 : i32
    %c0_i32_0 = arith.constant 0 : i32
    %c0_i32_1 = arith.constant 0 : i32
    return %c0_i32, %c0_i32_0 : i32, i32
  }
  func.func @transform_5(%arg0: i32) -> (i32, i32) {
    %c0_i32 = arith.constant 0 : i32
    %c0_i32_0 = arith.constant 0 : i32
    return %arg0, %c0_i32 : i32, i32
  }
}

</mosaic_0001>

<llo_original>
// kernel: encoder_forward.3
$region0: #{encoder_forward.3}
  #allocation0 [shape = 'u32[]', space=smem, size = 0x4, offset = 0x4, fixed_abs, tag = 'smem constant byte address 0x4 - core index']
  #allocation1 [shape = 'u32[72,128]{1,0:T(1,128)}', space=vmem, size = 0x9000, scoped, tag = 'internal scratch']
  #allocation2 [shape = 'f32[1,1]{1,0:T(1,128)S(6)}', space=smem, size = 0x200, scoped, tag = 'scoped memory for encoder_forward.3']
  %s0 = inlined_call_operand.vmem [shape: bf16[128,27], index: 0, kind: input, shape index: {}]
  %s1 = inlined_call_operand.vmem [shape: bf16[27,8], index: 1, kind: input, shape index: {}]
  %s2 = inlined_call_operand.vmem [shape: bf16[8,8], index: 2, kind: input, shape index: {}]
  %s3 = inlined_call_operand.vmem [shape: f32[1,8], index: 3, kind: input, shape index: {}]
  %s4 = inlined_call_operand.<no memory space> [shape: f32[1,1], index: 4, kind: input, shape index: {}]
  %s5 = inlined_call_operand.vmem [shape: bf16[128,8], index: 5, kind: output, shape index: {}]
  %s6 = sld [smem:[#allocation0]]
  $region53: #{encoder_forward.3} parent=0
    _
  %s8 = ssub.s32 1, %s6
  %s9 = scalar_select 0, %s8, %s6
  %10 = sst [smem:[#allocation2]] %s4
  loop: start=0, step=1, limit=4
  $region2: #{encoder_forward.3} parent=0 // loop_pre_header
    _
  $region3: #{encoder_forward.3} parent=0 // loop_header
    %s12 = sphi 0, %s16
    %p13 = scmp.ge.s32.totalorder %s12, 4
    %s22 = sphi 0, %s24
    %s25 = sphi 0, %s22
    %s26 = sphi 0, %s25
    %s42 = sphi 0, %s26
    %s46 = sphi 0, %s46
    %s48 = sphi 0, %s46
    %s49 = sphi 0, %s48
    %s63 = sphi 0, %s49
    %s67 = sphi 0, %s67
    %s69 = sphi 0, %s67
    %s70 = sphi 0, %s69
    %s84 = sphi 0, %s70
    %s88 = sphi 0, %s88
    %s90 = sphi 0, %s88
    %s91 = sphi 0, %s90
    %s105 = sphi 0, %s91
    %s109 = sphi 0, %s109
    %s111 = sphi 0, %s109
    %s112 = sphi 0, %s111
    %s126 = sphi 0, %s112
    %s132 = sphi 0, %s134
    %s135 = sphi 0, %s132
    %s136 = sphi 0, %s135
    %s152 = sphi 0, %s136
  $region4: #{encoder_forward.3} parent=0 // loop_header_branch
    %15 = sbr.rel (%p13) target = $region8
  $region5: #{encoder_forward.3} parent=0 // loop_body
    %s17 = ssub.s32 %s12, 1
    %s18 = ssub.s32 %s12, 2
    %s19 = sadd.s32 %s12, 1
    %s20 = ssub.s32 %s12, %s19
    %p21 = scmp.eq.s32.totalorder %s20, 0
    %s23 = sadd.s32 %s22, 1
    %s24 = scalar_select %p21, %s22, %s23
    %p27 = pneg %p21
    %p28 = scmp.eq.s32.totalorder %s12, 1
    %p29 = por %p27, %p28
    %p30 = scmp.ne.s32.totalorder %s22, %s25
    %p31 = scmp.eq.s32.totalorder %s12, 0
    %p32 = por %p30, %p31
    %p33 = scmp.ne.s32.totalorder %s22, %s25
    %p34 = scmp.eq.s32.totalorder %s17, 1
    %p35 = por %p33, %p34
    %p36 = scmp.ne.s32.totalorder %s25, %s26
    %p37 = scmp.eq.s32.totalorder %s17, 0
    %p38 = por %p36, %p37
    %p39 = scmp.ne.s32.totalorder %s25, %s26
    %p40 = scmp.eq.s32.totalorder %s18, 1
    %p41 = por %p39, %p40
    %p43 = scmp.ne.s32.totalorder %s26, %s42
    %p44 = scmp.eq.s32.totalorder %s18, 0
    %p45 = por %p43, %p44
    %s47 = sadd.s32 %s46, 1
    %p50 = scmp.eq.s32.totalorder %s12, 1
    %p51 = scmp.ne.s32.totalorder %s46, %s48
    %p52 = scmp.eq.s32.totalorder %s12, 0
    %p53 = por %p51, %p52
    %p54 = scmp.ne.s32.totalorder %s46, %s48
    %p55 = scmp.eq.s32.totalorder %s17, 1
    %p56 = por %p54, %p55
    %p57 = scmp.ne.s32.totalorder %s48, %s49
    %p58 = scmp.eq.s32.totalorder %s17, 0
    %p59 = por %p57, %p58
    %p60 = scmp.ne.s32.totalorder %s48, %s49
    %p61 = scmp.eq.s32.totalorder %s18, 1
    %p62 = por %p60, %p61
    %p64 = scmp.ne.s32.totalorder %s49, %s63
    %p65 = scmp.eq.s32.totalorder %s18, 0
    %p66 = por %p64, %p65
    %s68 = sadd.s32 %s67, 1
    %p71 = scmp.eq.s32.totalorder %s12, 1
    %p72 = scmp.ne.s32.totalorder %s67, %s69
    %p73 = scmp.eq.s32.totalorder %s12, 0
    %p74 = por %p72, %p73
    %p75 = scmp.ne.s32.totalorder %s67, %s69
    %p76 = scmp.eq.s32.totalorder %s17, 1
    %p77 = por %p75, %p76
    %p78 = scmp.ne.s32.totalorder %s69, %s70
    %p79 = scmp.eq.s32.totalorder %s17, 0
    %p80 = por %p78, %p79
    %p81 = scmp.ne.s32.totalorder %s69, %s70
    %p82 = scmp.eq.s32.totalorder %s18, 1
    %p83 = por %p81, %p82
    %p85 = scmp.ne.s32.totalorder %s70, %s84
    %p86 = scmp.eq.s32.totalorder %s18, 0
    %p87 = por %p85, %p86
    %s89 = sadd.s32 %s88, 1
    %p92 = scmp.eq.s32.totalorder %s12, 1
    %p93 = scmp.ne.s32.totalorder %s88, %s90
    %p94 = scmp.eq.s32.totalorder %s12, 0
    %p95 = por %p93, %p94
    %p96 = scmp.ne.s32.totalorder %s88, %s90
    %p97 = scmp.eq.s32.totalorder %s17, 1
    %p98 = por %p96, %p97
    %p99 = scmp.ne.s32.totalorder %s90, %s91
    %p100 = scmp.eq.s32.totalorder %s17, 0
    %p101 = por %p99, %p100
    %p102 = scmp.ne.s32.totalorder %s90, %s91
    %p103 = scmp.eq.s32.totalorder %s18, 1
    %p104 = por %p102, %p103
    %p106 = scmp.ne.s32.totalorder %s91, %s105
    %p107 = scmp.eq.s32.totalorder %s18, 0
    %p108 = por %p106, %p107
    %s110 = sadd.s32 %s109, 1
    %p113 = scmp.eq.s32.totalorder %s12, 1
    %p114 = scmp.ne.s32.totalorder %s109, %s111
    %p115 = scmp.eq.s32.totalorder %s12, 0
    %p116 = por %p114, %p115
    %p117 = scmp.ne.s32.totalorder %s109, %s111
    %p118 = scmp.eq.s32.totalorder %s17, 1
    %p119 = por %p117, %p118
    %p120 = scmp.ne.s32.totalorder %s111, %s112
    %p121 = scmp.eq.s32.totalorder %s17, 0
    %p122 = por %p120, %p121
    %p123 = scmp.ne.s32.totalorder %s111, %s112
    %p124 = scmp.eq.s32.totalorder %s18, 1
    %p125 = por %p123, %p124
    %p127 = scmp.ne.s32.totalorder %s112, %s126
    %p128 = scmp.eq.s32.totalorder %s18, 0
    %p129 = por %p127, %p128
    %s130 = ssub.s32 %s12, %s19
    %p131 = scmp.eq.s32.totalorder %s130, 0
    %s133 = sadd.s32 %s132, 1
    %s134 = scalar_select %p131, %s132, %s133
    %p137 = pneg %p131
    %p138 = scmp.eq.s32.totalorder %s12, 1
    %p139 = por %p137, %p138
    %p140 = scmp.ne.s32.totalorder %s132, %s135
    %p141 = scmp.eq.s32.totalorder %s12, 0
    %p142 = por %p140, %p141
    %p143 = scmp.ne.s32.totalorder %s132, %s135
    %p144 = scmp.eq.s32.totalorder %s17, 1
    %p145 = por %p143, %p144
    %p146 = scmp.ne.s32.totalorder %s135, %s136
    %p147 = scmp.eq.s32.totalorder %s17, 0
    %p148 = por %p146, %p147
    %p149 = scmp.ne.s32.totalorder %s135, %s136
    %p150 = scmp.eq.s32.totalorder %s18, 1
    %p151 = por %p149, %p150
    %p153 = scmp.ne.s32.totalorder %s136, %s152
    %p154 = scmp.eq.s32.totalorder %s18, 0
    %p155 = por %p153, %p154
    %p156 = scmp.le.s32.totalorder 1, %s12
    %p157 = scmp.lt.s32.totalorder %s12, 3
    %p158 = pnand %p156, %p157
    %p159 = pneg %p158
    // Predicated region
    $region9: #{encoder_forward.3} parent=5 // pred_check
      _
    $region10: #{encoder_forward.3} parent=5 // pred_check_branch
      %161 = sbr.rel (%p158) target = $region12
    $region11: #{encoder_forward.3} parent=5 // pred_region
      %s162 = ssub.s32 %s12, 1
      // Predicated region
      $region13: #{encoder_forward.3} parent=11 // pred_check
        %p163 = pneg %p59
      $region14: #{encoder_forward.3} parent=11 // pred_check_branch
        %165 = sbr.rel (%p163) target = $region16
      $region15: #{encoder_forward.3} parent=11 // pred_region
        _
      $region16: #{encoder_forward.3} parent=11 // pred_fallthru
        _
      // Predicated region
      $region17: #{encoder_forward.3} parent=11 // pred_check
        %p166 = pneg %p80
      $region18: #{encoder_forward.3} parent=11 // pred_check_branch
        %168 = sbr.rel (%p166) target = $region20
      $region19: #{encoder_forward.3} parent=11 // pred_region
        _
      $region20: #{encoder_forward.3} parent=11 // pred_fallthru
        _
      // Predicated region
      $region21: #{encoder_forward.3} parent=11 // pred_check
        %p169 = pneg %p101
      $region22: #{encoder_forward.3} parent=11 // pred_check_branch
        %171 = sbr.rel (%p169) target = $region24
      $region23: #{encoder_forward.3} parent=11 // pred_region
        _
      $region24: #{encoder_forward.3} parent=11 // pred_fallthru
        _
      // Predicated region
      $region25: #{encoder_forward.3} parent=11 // pred_check
        %p172 = pneg %p122
      $region26: #{encoder_forward.3} parent=11 // pred_check_branch
        %174 = sbr.rel (%p172) target = $region28
      $region27: #{encoder_forward.3} parent=11 // pred_region
        _
      $region28: #{encoder_forward.3} parent=11 // pred_fallthru
        _
    $region12: #{encoder_forward.3} parent=5 // pred_fallthru
      _
    %p175 = scmp.lt.s32.totalorder %s12, 2
    // Predicated region
    $region29: #{encoder_forward.3} parent=5 // pred_check
      %p176 = pneg %p175
    $region30: #{encoder_forward.3} parent=5 // pred_check_branch
      %178 = sbr.rel (%p176) target = $region32
    $region31: #{encoder_forward.3} parent=5 // pred_region
      // Predicated region
      $region33: #{encoder_forward.3} parent=31 // pred_check
        %p179 = pneg %p32
      $region34: #{encoder_forward.3} parent=31 // pred_check_branch
        %181 = sbr.rel (%p179) target = $region36
      $region35: #{encoder_forward.3} parent=31 // pred_region
        %s182 = smul.u32 8, %s12
        %p183 = scmp.lt.s32.totalorder %s182, 15
        %s184 = scalar_select %p183, %s182, 15
        %s185 = smul.addr %s184, 4
        %s186 = scalar_lea.vmem %s0, %s185
        %s187 = smul.u32 8, %s12
      $region36: #{encoder_forward.3} parent=31 // pred_fallthru
        _
    $region32: #{encoder_forward.3} parent=5 // pred_fallthru
      _
    %p188 = scmp.le.s32.totalorder 1, %s12
    %p189 = scmp.lt.s32.totalorder %s12, 3
    %p190 = pnand %p188, %p189
    %p191 = pneg %p190
    // Predicated region
    $region37: #{encoder_forward.3} parent=5 // pred_check
      _
    $region38: #{encoder_forward.3} parent=5 // pred_check_branch
      %193 = sbr.rel (%p190) target = $region40
    $region39: #{encoder_forward.3} parent=5 // pred_region
      %s194 = ssub.s32 %s12, 1
      %s195 = smul.u32 8, %s17
      %p196 = scmp.lt.s32.totalorder %s195, 15
      %s197 = scalar_select %p196, %s195, 15
      %s198 = smul.addr %s197, 4
      %s199 = scalar_lea.vmem %s0, %s198
      %p200 = pneg %p38
      %p201 = pneg %p35
      %p202 = pneg %p59
      %p203 = pneg %p56
      %p204 = pneg %p80
      %p205 = pneg %p77
      %p206 = pneg %p101
      %p207 = pneg %p98
      %p208 = pneg %p122
      %p209 = pneg %p119
      %p210 = pneg %p148
      %p211 = pneg %p145
      %s212 = smul.u32 8, %s17
      %p213 = scmp.lt.s32.totalorder %s212, 15
      %s214 = scalar_select %p213, %s212, 15
      %s215 = smul.addr %s214, 4
      %s216 = scalar_lea.vmem %s5, %s215
      %s217 = smul.u32 8, %s17
      %p218 = scmp.lt.s32.totalorder %s217, 15
      %s219 = scalar_select %p218, %s217, 15
      %s220 = smul.addr %s219, 4
      %s221 = scalar_lea.vmem %s0, %s220
      %s222 = smul.u32 8, %s17
      %s223 = smul.u32 8, %s17
      %p224 = scmp.lt.s32.totalorder %s223, 15
      %s225 = scalar_select %p224, %s223, 15
      %s226 = smul.addr %s225, 4
      %s227 = scalar_lea.vmem %s5, %s226
      %s228 = smul.u32 8, %s17
      %v230 = vld [vmem:[%s221] sm:$0xf]
      %v231 = vld [vmem:[%s221 + $0x4] sm:$0xf]
      %v232 = vld [vmem:[%s221 + $0x8] sm:$0xf]
      %v233 = vld [vmem:[%s221 + $0xc] sm:$0xf]
      %v234 = vld [vmem:[%s221 + $0x10] sm:$0xf]
      %v235 = vld [vmem:[%s221 + $0x14] sm:$0xf]
      %v236 = vld [vmem:[%s221 + $0x18] sm:$0xf]
      %v237 = vld [vmem:[%s221 + $0x1c] sm:$0xf]
      %v238 = vld [vmem:[%s1] sm:$0xf]
      %v239 = vld [vmem:[%s1 + $0x4] sm:$0xf]
      %v240 = vld [vmem:[%s1 + $0x8] sm:$0xf]
      %v241 = vld [vmem:[%s1 + $0xc] sm:$0x3]
      %v250 = vunpack.c.l.b16 %v230
      %v251 = vunpack.c.l.b16 %v231
      %v252 = vunpack.c.l.b16 %v232
      %v253 = vunpack.c.l.b16 %v233
      %v254 = vunpack.c.l.b16 %v234
      %v255 = vunpack.c.l.b16 %v235
      %v256 = vunpack.c.l.b16 %v236
      %v257 = vunpack.c.l.b16 %v237
      %v258 = vpack.c.b16 %v251, %v250
      %v259 = vpack.c.b16 %v253, %v252
      %v260 = vpack.c.b16 %v255, %v254
      %v261 = vpack.c.b16 %v257, %v256
      %v266 = vunpack.c.l.b16 %v238
      %v267 = vunpack.c.l.b16 %v239
      %v268 = vunpack.c.l.b16 %v240
      %v269 = vunpack.c.l.b16 %v241
      %v270 = vpack.c.b16 %v267, %v266
      %v271 = vpack.c.b16 %v269, %v268
      %vm273 = vcmask 220160
      %v275 = vsel %vm273, %v258, 0
      %v278 = vsel %vm273, %v259, 0
      %v281 = vsel %vm273, %v260, 0
      %v284 = vsel %vm273, %v261, 0
      %vm286 = vcmask 1044480
      %vm287 = vcmask 1045504
      %v288 = vsel %vm286, 4294967295, 65535
      %v289 = vsel %vm287, %v288, 0
      %v291 = vand.u32 %v271, %v289
      %293 = vmatpush.bf16.msra.mxu0 0
      %294 = vmatpush.bf16.msra.mxu0 0
      %295 = vmatpush.bf16.msra.mxu0 0
      %296 = vmatpush.bf16.msra.mxu0 0
      %297 = vmatpush.bf16.msra.mxu0 0
      %298 = vmatpush.bf16.msra.mxu0 0
      %299 = vmatpush.bf16.msra.mxu0 %v291
      %300 = vmatpush.bf16.msra.mxu0 %v270
      %301 = vmatmul.bf16.gmra.mxu0 %v275
      %v302 = vpop.f32.mrf.mxu0
      %v303 = vadd.f32 0.0, %v302
      %v304 = vpop.f32.mrf.mxu0
      %v305 = vadd.f32 0.0, %v304
      %306 = vmatmul.bf16.gmra.mxu0 %v278
      %v307 = vpop.f32.mrf.mxu0
      %v308 = vadd.f32 0.0, %v307
      %v309 = vpop.f32.mrf.mxu0
      %v310 = vadd.f32 0.0, %v309
      %311 = vmatmul.bf16.gmra.mxu0 %v281
      %v312 = vpop.f32.mrf.mxu0
      %v313 = vadd.f32 0.0, %v312
      %v314 = vpop.f32.mrf.mxu0
      %v315 = vadd.f32 0.0, %v314
      %316 = vmatmul.bf16.gmra.mxu0 %v284
      %v317 = vpop.f32.mrf.mxu0
      %v318 = vadd.f32 0.0, %v317
      %v319 = vpop.f32.mrf.mxu0
      %v320 = vadd.f32 0.0, %v319
      %321 = vdwg.mxu0
      %v322 = vmul.f32 %v303, %v303
      %v323 = vmul.f32 %v305, %v305
      %v324 = vmul.f32 %v308, %v308
      %v325 = vmul.f32 %v310, %v310
      %v326 = vmul.f32 %v313, %v313
      %v327 = vmul.f32 %v315, %v315
      %v328 = vmul.f32 %v318, %v318
      %v329 = vmul.f32 %v320, %v320
      %v330 = vpack.c.bf16 %v323, %v322
      %v331 = vpack.c.bf16 %v325, %v324
      %v332 = vpack.c.bf16 %v327, %v326
      %v333 = vpack.c.bf16 %v329, %v328
      %v334 = vld [vmem:[%s2] sm:$0xf]
      %v335 = vld [vmem:[%s3] sm:$0x1]
      %v337 = vperm.slane %v335, 0
      %vm339 = vcmask 64512
      %v341 = vsel %vm339, %v330, 0
      %v344 = vsel %vm339, %v331, 0
      %v347 = vsel %vm339, %v332, 0
      %v350 = vsel %vm339, %v333, 0
      %vm352 = vcmask 1043456
      %v354 = vsel %vm352, %v334, 0
      %356 = vmatpush.bf16.msra.mxu0 0
      %357 = vmatpush.bf16.msra.mxu0 0
      %358 = vmatpush.bf16.msra.mxu0 0
      %359 = vmatpush.bf16.msra.mxu0 0
      %360 = vmatpush.bf16.msra.mxu0 0
      %361 = vmatpush.bf16.msra.mxu0 0
      %362 = vmatpush.bf16.msra.mxu0 0
      %363 = vmatpush.bf16.msra.mxu0 %v354
      %364 = vmatmul.bf16.gmra.mxu0 %v341
      %v365 = vpop.f32.mrf.mxu0
      %v366 = vadd.f32 %v337, %v365
      %v367 = vpop.f32.mrf.mxu0
      %v368 = vadd.f32 %v337, %v367
      %369 = vmatmul.bf16.gmra.mxu0 %v344
      %v370 = vpop.f32.mrf.mxu0
      %v371 = vadd.f32 %v337, %v370
      %v372 = vpop.f32.mrf.mxu0
      %v373 = vadd.f32 %v337, %v372
      %374 = vmatmul.bf16.gmra.mxu0 %v347
      %v375 = vpop.f32.mrf.mxu0
      %v376 = vadd.f32 %v337, %v375
      %v377 = vpop.f32.mrf.mxu0
      %v378 = vadd.f32 %v337, %v377
      %379 = vmatmul.bf16.gmra.mxu0 %v350
      %v380 = vpop.f32.mrf.mxu0
      %v381 = vadd.f32 %v337, %v380
      %v382 = vpop.f32.mrf.mxu0
      %v383 = vadd.f32 %v337, %v382
      %384 = vdwg.mxu0
      %v385 = vrsqrt.pop %v366
      %v386 = vmul.f32 %v385, %v366
      %v387 = vmul.f32 %v386, %v385
      %v388 = vmul.f32 0.5, %v387
      %v389 = vsub.f32 1.5, %v388
      %v390 = vmul.f32 %v385, %v389
      %vm391 = vweird.f32 %v366
      %vm392 = vweird.f32 %v385
      %vm393 = vmor %vm391, %vm392
      %v394 = vsel %vm393, %v385, %v390
      %v395 = vrsqrt.pop %v368
      %v396 = vmul.f32 %v395, %v368
      %v397 = vmul.f32 %v396, %v395
      %v398 = vmul.f32 0.5, %v397
      %v399 = vsub.f32 1.5, %v398
      %v400 = vmul.f32 %v395, %v399
      %vm401 = vweird.f32 %v368
      %vm402 = vweird.f32 %v395
      %vm403 = vmor %vm401, %vm402
      %v404 = vsel %vm403, %v395, %v400
      %v405 = vrsqrt.pop %v371
      %v406 = vmul.f32 %v405, %v371
      %v407 = vmul.f32 %v406, %v405
      %v408 = vmul.f32 0.5, %v407
      %v409 = vsub.f32 1.5, %v408
      %v410 = vmul.f32 %v405, %v409
      %vm411 = vweird.f32 %v371
      %vm412 = vweird.f32 %v405
      %vm413 = vmor %vm411, %vm412
      %v414 = vsel %vm413, %v405, %v410
      %v415 = vrsqrt.pop %v373
      %v416 = vmul.f32 %v415, %v373
      %v417 = vmul.f32 %v416, %v415
      %v418 = vmul.f32 0.5, %v417
      %v419 = vsub.f32 1.5, %v418
      %v420 = vmul.f32 %v415, %v419
      %vm421 = vweird.f32 %v373
      %vm422 = vweird.f32 %v415
      %vm423 = vmor %vm421, %vm422
      %v424 = vsel %vm423, %v415, %v420
      %v425 = vrsqrt.pop %v376
      %v426 = vmul.f32 %v425, %v376
      %v427 = vmul.f32 %v426, %v425
      %v428 = vmul.f32 0.5, %v427
      %v429 = vsub.f32 1.5, %v428
      %v430 = vmul.f32 %v425, %v429
      %vm431 = vweird.f32 %v376
      %vm432 = vweird.f32 %v425
      %vm433 = vmor %vm431, %vm432
      %v434 = vsel %vm433, %v425, %v430
      %v435 = vrsqrt.pop %v378
      %v436 = vmul.f32 %v435, %v378
      %v437 = vmul.f32 %v436, %v435
      %v438 = vmul.f32 0.5, %v437
      %v439 = vsub.f32 1.5, %v438
      %v440 = vmul.f32 %v435, %v439
      %vm441 = vweird.f32 %v378
      %vm442 = vweird.f32 %v435
      %vm443 = vmor %vm441, %vm442
      %v444 = vsel %vm443, %v435, %v440
      %v445 = vrsqrt.pop %v381
      %v446 = vmul.f32 %v445, %v381
      %v447 = vmul.f32 %v446, %v445
      %v448 = vmul.f32 0.5, %v447
      %v449 = vsub.f32 1.5, %v448
      %v450 = vmul.f32 %v445, %v449
      %vm451 = vweird.f32 %v381
      %vm452 = vweird.f32 %v445
      %vm453 = vmor %vm451, %vm452
      %v454 = vsel %vm453, %v445, %v450
      %v455 = vrsqrt.pop %v383
      %v456 = vmul.f32 %v455, %v383
      %v457 = vmul.f32 %v456, %v455
      %v458 = vmul.f32 0.5, %v457
      %v459 = vsub.f32 1.5, %v458
      %v460 = vmul.f32 %v455, %v459
      %vm461 = vweird.f32 %v383
      %vm462 = vweird.f32 %v455
      %vm463 = vmor %vm461, %vm462
      %v464 = vsel %vm463, %v455, %v460
      %v465 = vmul.f32 %v303, %v394
      %v466 = vmul.f32 %v305, %v404
      %v467 = vmul.f32 %v308, %v414
      %v468 = vmul.f32 %v310, %v424
      %v469 = vmul.f32 %v313, %v434
      %v470 = vmul.f32 %v315, %v444
      %v471 = vmul.f32 %v318, %v454
      %v472 = vmul.f32 %v320, %v464
      %s473 = sld [smem:[#allocation2]]
      %vm474 = vcmp.ge.f32.partialorder %v465, 0.0
      %vm475 = vcmp.ge.f32.partialorder %v466, 0.0
      %vm476 = vcmp.ge.f32.partialorder %v467, 0.0
      %vm477 = vcmp.ge.f32.partialorder %v468, 0.0
      %vm478 = vcmp.ge.f32.partialorder %v469, 0.0
      %vm479 = vcmp.ge.f32.partialorder %v470, 0.0
      %vm480 = vcmp.ge.f32.partialorder %v471, 0.0
      %vm481 = vcmp.ge.f32.partialorder %v472, 0.0
      %v482 = vstv %s473
      %v483 = vmul.f32 %v482, %v465
      %v484 = vmul.f32 %v482, %v466
      %v485 = vmul.f32 %v482, %v467
      %v486 = vmul.f32 %v482, %v468
      %v487 = vmul.f32 %v482, %v469
      %v488 = vmul.f32 %v482, %v470
      %v489 = vmul.f32 %v482, %v471
      %v490 = vmul.f32 %v482, %v472
      %v491 = vsel %vm474, %v465, %v483
      %v492 = vsel %vm475, %v466, %v484
      %v493 = vsel %vm476, %v467, %v485
      %v494 = vsel %vm477, %v468, %v486
      %v495 = vsel %vm478, %v469, %v487
      %v496 = vsel %vm479, %v470, %v488
      %v497 = vsel %vm480, %v471, %v489
      %v498 = vsel %vm481, %v472, %v490
      %v499 = vpack.c.bf16 %v491, %v491
      %v500 = vpack.c.bf16 %v492, %v492
      %v501 = vpack.c.bf16 %v493, %v493
      %v502 = vpack.c.bf16 %v494, %v494
      %v503 = vpack.c.bf16 %v495, %v495
      %v504 = vpack.c.bf16 %v496, %v496
      %v505 = vpack.c.bf16 %v497, %v497
      %v506 = vpack.c.bf16 %v498, %v498
      %vm507 = vcmask 60416
      %508 = vst.msk [vmem:[%s227] sm:$0xf] %vm507, %v499
      %509 = vst.msk [vmem:[%s227 + $0x4] sm:$0xf] %vm507, %v500
      %510 = vst.msk [vmem:[%s227 + $0x8] sm:$0xf] %vm507, %v501
      %511 = vst.msk [vmem:[%s227 + $0xc] sm:$0xf] %vm507, %v502
      %512 = vst.msk [vmem:[%s227 + $0x10] sm:$0xf] %vm507, %v503
      %513 = vst.msk [vmem:[%s227 + $0x14] sm:$0xf] %vm507, %v504
      %514 = vst.msk [vmem:[%s227 + $0x18] sm:$0xf] %vm507, %v505
      %515 = vst.msk [vmem:[%s227 + $0x1c] sm:$0xf] %vm507, %v506
      %s516 = smul.u32 8, %s17
      %p517 = scmp.lt.s32.totalorder %s516, 15
      %s518 = scalar_select %p517, %s516, 15
      %s519 = smul.addr %s518, 4
      %s520 = scalar_lea.vmem %s5, %s519
      // Predicated region
      $region41: #{encoder_forward.3} parent=39 // pred_check
        %p521 = pneg %p145
      $region42: #{encoder_forward.3} parent=39 // pred_check_branch
        %523 = sbr.rel (%p521) target = $region44
      $region43: #{encoder_forward.3} parent=39 // pred_region
        %s524 = smul.u32 8, %s17
      $region44: #{encoder_forward.3} parent=39 // pred_fallthru
        _
    $region40: #{encoder_forward.3} parent=5 // pred_fallthru
      _
    %p525 = scmp.le.s32.totalorder 2, %s12
    // Predicated region
    $region45: #{encoder_forward.3} parent=5 // pred_check
      %p526 = pneg %p525
    $region46: #{encoder_forward.3} parent=5 // pred_check_branch
      %528 = sbr.rel (%p526) target = $region48
    $region47: #{encoder_forward.3} parent=5 // pred_region
      %s529 = ssub.s32 %s12, 2
      // Predicated region
      $region49: #{encoder_forward.3} parent=47 // pred_check
        %p530 = pneg %p151
      $region50: #{encoder_forward.3} parent=47 // pred_check_branch
        %532 = sbr.rel (%p530) target = $region52
      $region51: #{encoder_forward.3} parent=47 // pred_region
        %s533 = smul.u32 8, %s18
        %p534 = scmp.lt.s32.totalorder %s533, 15
        %s535 = scalar_select %p534, %s533, 15
        %s536 = smul.addr %s535, 4
        %s537 = scalar_lea.vmem %s5, %s536
      $region52: #{encoder_forward.3} parent=47 // pred_fallthru
        _
    $region48: #{encoder_forward.3} parent=5 // pred_fallthru
      _
  $region6: #{encoder_forward.3} parent=0 // loop_footer
    %s16 = sadd.s32 1, %s12
  $region7: #{encoder_forward.3} parent=0 // loop_footer_branch
    %11 = sbr.rel target = $region3
  $region8: #{encoder_forward.3} parent=0 // loop_exit
    _

// kernel: encoder_forward.4
$region0: #{encoder_forward.4}
  #allocation0 [shape = 'u32[]', space=smem, size = 0x4, offset = 0x4, fixed_abs, tag = 'smem constant byte address 0x4 - core index']
  #allocation1 [shape = 'u32[72,128]{1,0:T(1,128)}', space=vmem, size = 0x9000, scoped, tag = 'internal scratch']
  #allocation2 [shape = 'f32[1,1]{1,0:T(1,128)S(6)}', space=smem, size = 0x200, scoped, tag = 'scoped memory for encoder_forward.4']
  %s0 = inlined_call_operand.vmem [shape: bf16[32,72], index: 0, kind: input, shape index: {}]
  %s1 = inlined_call_operand.vmem [shape: bf16[72,8], index: 1, kind: input, shape index: {}]
  %s2 = inlined_call_operand.vmem [shape: bf16[8,8], index: 2, kind: input, shape index: {}]
  %s3 = inlined_call_operand.vmem [shape: f32[1,8], index: 3, kind: input, shape index: {}]
  %s4 = inlined_call_operand.<no memory space> [shape: f32[1,1], index: 4, kind: input, shape index: {}]
  %s5 = inlined_call_operand.vmem [shape: bf16[32,8], index: 5, kind: output, shape index: {}]
  %s6 = sld [smem:[#allocation0]]
  $region53: #{encoder_forward.4} parent=0
    _
  %s8 = ssub.s32 1, %s6
  %s9 = scalar_select 0, %s8, %s6
  %10 = sst [smem:[#allocation2]] %s4
  loop: start=0, step=1, limit=4
  $region2: #{encoder_forward.4} parent=0 // loop_pre_header
    _
  $region3: #{encoder_forward.4} parent=0 // loop_header
    %s12 = sphi 0, %s16
    %p13 = scmp.ge.s32.totalorder %s12, 4
    %s22 = sphi 0, %s24
    %s25 = sphi 0, %s22
    %s26 = sphi 0, %s25
    %s42 = sphi 0, %s26
    %s46 = sphi 0, %s46
    %s48 = sphi 0, %s46
    %s49 = sphi 0, %s48
    %s63 = sphi 0, %s49
    %s67 = sphi 0, %s67
    %s69 = sphi 0, %s67
    %s70 = sphi 0, %s69
    %s84 = sphi 0, %s70
    %s88 = sphi 0, %s88
    %s90 = sphi 0, %s88
    %s91 = sphi 0, %s90
    %s105 = sphi 0, %s91
    %s109 = sphi 0, %s109
    %s111 = sphi 0, %s109
    %s112 = sphi 0, %s111
    %s126 = sphi 0, %s112
    %s132 = sphi 0, %s134
    %s135 = sphi 0, %s132
    %s136 = sphi 0, %s135
    %s152 = sphi 0, %s136
  $region4: #{encoder_forward.4} parent=0 // loop_header_branch
    %15 = sbr.rel (%p13) target = $region8
  $region5: #{encoder_forward.4} parent=0 // loop_body
    %s17 = ssub.s32 %s12, 1
    %s18 = ssub.s32 %s12, 2
    %s19 = sadd.s32 %s12, 1
    %s20 = ssub.s32 %s12, %s19
    %p21 = scmp.eq.s32.totalorder %s20, 0
    %s23 = sadd.s32 %s22, 1
    %s24 = scalar_select %p21, %s22, %s23
    %p27 = pneg %p21
    %p28 = scmp.eq.s32.totalorder %s12, 1
    %p29 = por %p27, %p28
    %p30 = scmp.ne.s32.totalorder %s22, %s25
    %p31 = scmp.eq.s32.totalorder %s12, 0
    %p32 = por %p30, %p31
    %p33 = scmp.ne.s32.totalorder %s22, %s25
    %p34 = scmp.eq.s32.totalorder %s17, 1
    %p35 = por %p33, %p34
    %p36 = scmp.ne.s32.totalorder %s25, %s26
    %p37 = scmp.eq.s32.totalorder %s17, 0
    %p38 = por %p36, %p37
    %p39 = scmp.ne.s32.totalorder %s25, %s26
    %p40 = scmp.eq.s32.totalorder %s18, 1
    %p41 = por %p39, %p40
    %p43 = scmp.ne.s32.totalorder %s26, %s42
    %p44 = scmp.eq.s32.totalorder %s18, 0
    %p45 = por %p43, %p44
    %s47 = sadd.s32 %s46, 1
    %p50 = scmp.eq.s32.totalorder %s12, 1
    %p51 = scmp.ne.s32.totalorder %s46, %s48
    %p52 = scmp.eq.s32.totalorder %s12, 0
    %p53 = por %p51, %p52
    %p54 = scmp.ne.s32.totalorder %s46, %s48
    %p55 = scmp.eq.s32.totalorder %s17, 1
    %p56 = por %p54, %p55
    %p57 = scmp.ne.s32.totalorder %s48, %s49
    %p58 = scmp.eq.s32.totalorder %s17, 0
    %p59 = por %p57, %p58
    %p60 = scmp.ne.s32.totalorder %s48, %s49
    %p61 = scmp.eq.s32.totalorder %s18, 1
    %p62 = por %p60, %p61
    %p64 = scmp.ne.s32.totalorder %s49, %s63
    %p65 = scmp.eq.s32.totalorder %s18, 0
    %p66 = por %p64, %p65
    %s68 = sadd.s32 %s67, 1
    %p71 = scmp.eq.s32.totalorder %s12, 1
    %p72 = scmp.ne.s32.totalorder %s67, %s69
    %p73 = scmp.eq.s32.totalorder %s12, 0
    %p74 = por %p72, %p73
    %p75 = scmp.ne.s32.totalorder %s67, %s69
    %p76 = scmp.eq.s32.totalorder %s17, 1
    %p77 = por %p75, %p76
    %p78 = scmp.ne.s32.totalorder %s69, %s70
    %p79 = scmp.eq.s32.totalorder %s17, 0
    %p80 = por %p78, %p79
    %p81 = scmp.ne.s32.totalorder %s69, %s70
    %p82 = scmp.eq.s32.totalorder %s18, 1
    %p83 = por %p81, %p82
    %p85 = scmp.ne.s32.totalorder %s70, %s84
    %p86 = scmp.eq.s32.totalorder %s18, 0
    %p87 = por %p85, %p86
    %s89 = sadd.s32 %s88, 1
    %p92 = scmp.eq.s32.totalorder %s12, 1
    %p93 = scmp.ne.s32.totalorder %s88, %s90
    %p94 = scmp.eq.s32.totalorder %s12, 0
    %p95 = por %p93, %p94
    %p96 = scmp.ne.s32.totalorder %s88, %s90
    %p97 = scmp.eq.s32.totalorder %s17, 1
    %p98 = por %p96, %p97
    %p99 = scmp.ne.s32.totalorder %s90, %s91
    %p100 = scmp.eq.s32.totalorder %s17, 0
    %p101 = por %p99, %p100
    %p102 = scmp.ne.s32.totalorder %s90, %s91
    %p103 = scmp.eq.s32.totalorder %s18, 1
    %p104 = por %p102, %p103
    %p106 = scmp.ne.s32.totalorder %s91, %s105
    %p107 = scmp.eq.s32.totalorder %s18, 0
    %p108 = por %p106, %p107
    %s110 = sadd.s32 %s109, 1
    %p113 = scmp.eq.s32.totalorder %s12, 1
    %p114 = scmp.ne.s32.totalorder %s109, %s111
    %p115 = scmp.eq.s32.totalorder %s12, 0
    %p116 = por %p114, %p115
    %p117 = scmp.ne.s32.totalorder %s109, %s111
    %p118 = scmp.eq.s32.totalorder %s17, 1
    %p119 = por %p117, %p118
    %p120 = scmp.ne.s32.totalorder %s111, %s112
    %p121 = scmp.eq.s32.totalorder %s17, 0
    %p122 = por %p120, %p121
    %p123 = scmp.ne.s32.totalorder %s111, %s112
    %p124 = scmp.eq.s32.totalorder %s18, 1
    %p125 = por %p123, %p124
    %p127 = scmp.ne.s32.totalorder %s112, %s126
    %p128 = scmp.eq.s32.totalorder %s18, 0
    %p129 = por %p127, %p128
    %s130 = ssub.s32 %s12, %s19
    %p131 = scmp.eq.s32.totalorder %s130, 0
    %s133 = sadd.s32 %s132, 1
    %s134 = scalar_select %p131, %s132, %s133
    %p137 = pneg %p131
    %p138 = scmp.eq.s32.totalorder %s12, 1
    %p139 = por %p137, %p138
    %p140 = scmp.ne.s32.totalorder %s132, %s135
    %p141 = scmp.eq.s32.totalorder %s12, 0
    %p142 = por %p140, %p141
    %p143 = scmp.ne.s32.totalorder %s132, %s135
    %p144 = scmp.eq.s32.totalorder %s17, 1
    %p145 = por %p143, %p144
    %p146 = scmp.ne.s32.totalorder %s135, %s136
    %p147 = scmp.eq.s32.totalorder %s17, 0
    %p148 = por %p146, %p147
    %p149 = scmp.ne.s32.totalorder %s135, %s136
    %p150 = scmp.eq.s32.totalorder %s18, 1
    %p151 = por %p149, %p150
    %p153 = scmp.ne.s32.totalorder %s136, %s152
    %p154 = scmp.eq.s32.totalorder %s18, 0
    %p155 = por %p153, %p154
    %p156 = scmp.le.s32.totalorder 1, %s12
    %p157 = scmp.lt.s32.totalorder %s12, 3
    %p158 = pnand %p156, %p157
    %p159 = pneg %p158
    // Predicated region
    $region9: #{encoder_forward.4} parent=5 // pred_check
      _
    $region10: #{encoder_forward.4} parent=5 // pred_check_branch
      %161 = sbr.rel (%p158) target = $region12
    $region11: #{encoder_forward.4} parent=5 // pred_region
      %s162 = ssub.s32 %s12, 1
      // Predicated region
      $region13: #{encoder_forward.4} parent=11 // pred_check
        %p163 = pneg %p59
      $region14: #{encoder_forward.4} parent=11 // pred_check_branch
        %165 = sbr.rel (%p163) target = $region16
      $region15: #{encoder_forward.4} parent=11 // pred_region
        _
      $region16: #{encoder_forward.4} parent=11 // pred_fallthru
        _
      // Predicated region
      $region17: #{encoder_forward.4} parent=11 // pred_check
        %p166 = pneg %p80
      $region18: #{encoder_forward.4} parent=11 // pred_check_branch
        %168 = sbr.rel (%p166) target = $region20
      $region19: #{encoder_forward.4} parent=11 // pred_region
        _
      $region20: #{encoder_forward.4} parent=11 // pred_fallthru
        _
      // Predicated region
      $region21: #{encoder_forward.4} parent=11 // pred_check
        %p169 = pneg %p101
      $region22: #{encoder_forward.4} parent=11 // pred_check_branch
        %171 = sbr.rel (%p169) target = $region24
      $region23: #{encoder_forward.4} parent=11 // pred_region
        _
      $region24: #{encoder_forward.4} parent=11 // pred_fallthru
        _
      // Predicated region
      $region25: #{encoder_forward.4} parent=11 // pred_check
        %p172 = pneg %p122
      $region26: #{encoder_forward.4} parent=11 // pred_check_branch
        %174 = sbr.rel (%p172) target = $region28
      $region27: #{encoder_forward.4} parent=11 // pred_region
        _
      $region28: #{encoder_forward.4} parent=11 // pred_fallthru
        _
    $region12: #{encoder_forward.4} parent=5 // pred_fallthru
      _
    %p175 = scmp.lt.s32.totalorder %s12, 2
    // Predicated region
    $region29: #{encoder_forward.4} parent=5 // pred_check
      %p176 = pneg %p175
    $region30: #{encoder_forward.4} parent=5 // pred_check_branch
      %178 = sbr.rel (%p176) target = $region32
    $region31: #{encoder_forward.4} parent=5 // pred_region
      // Predicated region
      $region33: #{encoder_forward.4} parent=31 // pred_check
        %p179 = pneg %p32
      $region34: #{encoder_forward.4} parent=31 // pred_check_branch
        %181 = sbr.rel (%p179) target = $region36
      $region35: #{encoder_forward.4} parent=31 // pred_region
        %s182 = smul.u32 2, %s12
        %p183 = scmp.lt.s32.totalorder %s182, 3
        %s184 = scalar_select %p183, %s182, 3
        %s185 = smul.addr %s184, 4
        %s186 = scalar_lea.vmem %s0, %s185
        %s187 = smul.u32 2, %s12
      $region36: #{encoder_forward.4} parent=31 // pred_fallthru
        _
    $region32: #{encoder_forward.4} parent=5 // pred_fallthru
      _
    %p188 = scmp.le.s32.totalorder 1, %s12
    %p189 = scmp.lt.s32.totalorder %s12, 3
    %p190 = pnand %p188, %p189
    %p191 = pneg %p190
    // Predicated region
    $region37: #{encoder_forward.4} parent=5 // pred_check
      _
    $region38: #{encoder_forward.4} parent=5 // pred_check_branch
      %193 = sbr.rel (%p190) target = $region40
    $region39: #{encoder_forward.4} parent=5 // pred_region
      %s194 = ssub.s32 %s12, 1
      %s195 = smul.u32 2, %s17
      %p196 = scmp.lt.s32.totalorder %s195, 3
      %s197 = scalar_select %p196, %s195, 3
      %s198 = smul.addr %s197, 4
      %s199 = scalar_lea.vmem %s0, %s198
      %p200 = pneg %p38
      %p201 = pneg %p35
      %p202 = pneg %p59
      %p203 = pneg %p56
      %p204 = pneg %p80
      %p205 = pneg %p77
      %p206 = pneg %p101
      %p207 = pneg %p98
      %p208 = pneg %p122
      %p209 = pneg %p119
      %p210 = pneg %p148
      %p211 = pneg %p145
      %s212 = smul.u32 2, %s17
      %p213 = scmp.lt.s32.totalorder %s212, 3
      %s214 = scalar_select %p213, %s212, 3
      %s215 = smul.addr %s214, 4
      %s216 = scalar_lea.vmem %s5, %s215
      %s217 = smul.u32 2, %s17
      %p218 = scmp.lt.s32.totalorder %s217, 3
      %s219 = scalar_select %p218, %s217, 3
      %s220 = smul.addr %s219, 4
      %s221 = scalar_lea.vmem %s0, %s220
      %s222 = smul.u32 2, %s17
      %s223 = smul.u32 2, %s17
      %p224 = scmp.lt.s32.totalorder %s223, 3
      %s225 = scalar_select %p224, %s223, 3
      %s226 = smul.addr %s225, 4
      %s227 = scalar_lea.vmem %s5, %s226
      %s228 = smul.u32 2, %s17
      %v230 = vld [vmem:[%s221] sm:$0xf]
      %v231 = vld [vmem:[%s221 + $0x4] sm:$0xf]
      %v232 = vld [vmem:[%s1] sm:$0xf]
      %v233 = vld [vmem:[%s1 + $0x4] sm:$0xf]
      %v234 = vld [vmem:[%s1 + $0x8] sm:$0xf]
      %v235 = vld [vmem:[%s1 + $0xc] sm:$0xf]
      %v236 = vld [vmem:[%s1 + $0x10] sm:$0xf]
      %v237 = vld [vmem:[%s1 + $0x14] sm:$0xf]
      %v238 = vld [vmem:[%s1 + $0x18] sm:$0xf]
      %v239 = vld [vmem:[%s1 + $0x1c] sm:$0xf]
      %v240 = vld [vmem:[%s1 + $0x20] sm:$0xf]
      %v243 = vunpack.c.l.b16 %v230
      %v244 = vunpack.c.l.b16 %v231
      %v245 = vpack.c.b16 %v244, %v243
      %v255 = vunpack.c.l.b16 %v232
      %v256 = vunpack.c.l.b16 %v233
      %v257 = vunpack.c.l.b16 %v234
      %v258 = vunpack.c.l.b16 %v235
      %v259 = vunpack.c.l.b16 %v236
      %v260 = vunpack.c.l.b16 %v237
      %v261 = vunpack.c.l.b16 %v238
      %v262 = vunpack.c.l.b16 %v239
      %v263 = vunpack.c.l.b16 %v240
      %v264 = vpack.c.b16 %v256, %v255
      %v265 = vpack.c.b16 %v258, %v257
      %v266 = vpack.c.b16 %v260, %v259
      %v267 = vpack.c.b16 %v262, %v261
      %v268 = vpack.c.b16 %v263, %v263
      %vm273 = vcmask 588800
      %v275 = vsel %vm273, %v245, 0
      %vm277 = vcmask 1043456
      %v279 = vsel %vm277, %v268, 0
      %281 = vmatpush.bf16.msra.mxu0 0
      %282 = vmatpush.bf16.msra.mxu0 0
      %283 = vmatpush.bf16.msra.mxu0 0
      %284 = vmatpush.bf16.msra.mxu0 %v279
      %285 = vmatpush.bf16.msra.mxu0 %v267
      %286 = vmatpush.bf16.msra.mxu0 %v266
      %287 = vmatpush.bf16.msra.mxu0 %v265
      %288 = vmatpush.bf16.msra.mxu0 %v264
      %289 = vmatmul.bf16.gmra.mxu0 %v275
      %v290 = vpop.f32.mrf.mxu0
      %v291 = vadd.f32 0.0, %v290
      %v292 = vpop.f32.mrf.mxu0
      %v293 = vadd.f32 0.0, %v292
      %294 = vdwg.mxu0
      %v295 = vmul.f32 %v291, %v291
      %v296 = vmul.f32 %v293, %v293
      %v297 = vpack.c.bf16 %v296, %v295
      %v298 = vld [vmem:[%s2] sm:$0xf]
      %v299 = vld [vmem:[%s3] sm:$0x1]
      %v301 = vperm.slane %v299, 0
      %vm303 = vcmask 64512
      %v305 = vsel %vm303, %v297, 0
      %v308 = vsel %vm277, %v298, 0
      %310 = vmatpush.bf16.msra.mxu0 0
      %311 = vmatpush.bf16.msra.mxu0 0
      %312 = vmatpush.bf16.msra.mxu0 0
      %313 = vmatpush.bf16.msra.mxu0 0
      %314 = vmatpush.bf16.msra.mxu0 0
      %315 = vmatpush.bf16.msra.mxu0 0
      %316 = vmatpush.bf16.msra.mxu0 0
      %317 = vmatpush.bf16.msra.mxu0 %v308
      %318 = vmatmul.bf16.gmra.mxu0 %v305
      %v319 = vpop.f32.mrf.mxu0
      %v320 = vadd.f32 %v301, %v319
      %v321 = vpop.f32.mrf.mxu0
      %v322 = vadd.f32 %v301, %v321
      %323 = vdwg.mxu0
      %v324 = vrsqrt.pop %v320
      %v325 = vmul.f32 %v324, %v320
      %v326 = vmul.f32 %v325, %v324
      %v327 = vmul.f32 0.5, %v326
      %v328 = vsub.f32 1.5, %v327
      %v329 = vmul.f32 %v324, %v328
      %vm330 = vweird.f32 %v320
      %vm331 = vweird.f32 %v324
      %vm332 = vmor %vm330, %vm331
      %v333 = vsel %vm332, %v324, %v329
      %v334 = vrsqrt.pop %v322
      %v335 = vmul.f32 %v334, %v322
      %v336 = vmul.f32 %v335, %v334
      %v337 = vmul.f32 0.5, %v336
      %v338 = vsub.f32 1.5, %v337
      %v339 = vmul.f32 %v334, %v338
      %vm340 = vweird.f32 %v322
      %vm341 = vweird.f32 %v334
      %vm342 = vmor %vm340, %vm341
      %v343 = vsel %vm342, %v334, %v339
      %v344 = vmul.f32 %v291, %v333
      %v345 = vmul.f32 %v293, %v343
      %s346 = sld [smem:[#allocation2]]
      %vm347 = vcmp.ge.f32.partialorder %v344, 0.0
      %vm348 = vcmp.ge.f32.partialorder %v345, 0.0
      %v349 = vstv %s346
      %v350 = vmul.f32 %v349, %v344
      %v351 = vmul.f32 %v349, %v345
      %v352 = vsel %vm347, %v344, %v350
      %v353 = vsel %vm348, %v345, %v351
      %v354 = vpack.c.bf16 %v352, %v352
      %v355 = vpack.c.bf16 %v353, %v353
      %vm356 = vcmask 60416
      %357 = vst.msk [vmem:[%s227] sm:$0xf] %vm356, %v354
      %358 = vst.msk [vmem:[%s227 + $0x4] sm:$0xf] %vm356, %v355
      %s359 = smul.u32 2, %s17
      %p360 = scmp.lt.s32.totalorder %s359, 3
      %s361 = scalar_select %p360, %s359, 3
      %s362 = smul.addr %s361, 4
      %s363 = scalar_lea.vmem %s5, %s362
      // Predicated region
      $region41: #{encoder_forward.4} parent=39 // pred_check
        %p364 = pneg %p145
      $region42: #{encoder_forward.4} parent=39 // pred_check_branch
        %366 = sbr.rel (%p364) target = $region44
      $region43: #{encoder_forward.4} parent=39 // pred_region
        %s367 = smul.u32 2, %s17
      $region44: #{encoder_forward.4} parent=39 // pred_fallthru
        _
    $region40: #{encoder_forward.4} parent=5 // pred_fallthru
      _
    %p368 = scmp.le.s32.totalorder 2, %s12
    // Predicated region
    $region45: #{encoder_forward.4} parent=5 // pred_check
      %p369 = pneg %p368
    $region46: #{encoder_forward.4} parent=5 // pred_check_branch
      %371 = sbr.rel (%p369) target = $region48
    $region47: #{encoder_forward.4} parent=5 // pred_region
      %s372 = ssub.s32 %s12, 2
      // Predicated region
      $region49: #{encoder_forward.4} parent=47 // pred_check
        %p373 = pneg %p151
      $region50: #{encoder_forward.4} parent=47 // pred_check_branch
        %375 = sbr.rel (%p373) target = $region52
      $region51: #{encoder_forward.4} parent=47 // pred_region
        %s376 = smul.u32 2, %s18
        %p377 = scmp.lt.s32.totalorder %s376, 3
        %s378 = scalar_select %p377, %s376, 3
        %s379 = smul.addr %s378, 4
        %s380 = scalar_lea.vmem %s5, %s379
      $region52: #{encoder_forward.4} parent=47 // pred_fallthru
        _
    $region48: #{encoder_forward.4} parent=5 // pred_fallthru
      _
  $region6: #{encoder_forward.4} parent=0 // loop_footer
    %s16 = sadd.s32 1, %s12
  $region7: #{encoder_forward.4} parent=0 // loop_footer_branch
    %11 = sbr.rel target = $region3
  $region8: #{encoder_forward.4} parent=0 // loop_exit
    _

// kernel: encoder_forward.5
$region0: #{encoder_forward.5}
  #allocation0 [shape = 'u32[]', space=smem, size = 0x4, offset = 0x4, fixed_abs, tag = 'smem constant byte address 0x4 - core index']
  #allocation1 [shape = 'u32[72,128]{1,0:T(1,128)}', space=vmem, size = 0x9000, scoped, tag = 'internal scratch']
  #allocation2 [shape = 'f32[1,1]{1,0:T(1,128)S(6)}', space=smem, size = 0x200, scoped, tag = 'scoped memory for encoder_forward.5']
  %s0 = inlined_call_operand.vmem [shape: bf16[32,72], index: 0, kind: input, shape index: {}]
  %s1 = inlined_call_operand.vmem [shape: bf16[72,4], index: 1, kind: input, shape index: {}]
  %s2 = inlined_call_operand.vmem [shape: bf16[4,4], index: 2, kind: input, shape index: {}]
  %s3 = inlined_call_operand.vmem [shape: f32[1,4], index: 3, kind: input, shape index: {}]
  %s4 = inlined_call_operand.<no memory space> [shape: f32[1,1], index: 4, kind: input, shape index: {}]
  %s5 = inlined_call_operand.vmem [shape: f32[32,4], index: 5, kind: output, shape index: {}]
  %s6 = sld [smem:[#allocation0]]
  $region53: #{encoder_forward.5} parent=0
    _
  %s8 = ssub.s32 1, %s6
  %s9 = scalar_select 0, %s8, %s6
  %10 = sst [smem:[#allocation2]] %s4
  loop: start=0, step=1, limit=4
  $region2: #{encoder_forward.5} parent=0 // loop_pre_header
    _
  $region3: #{encoder_forward.5} parent=0 // loop_header
    %s12 = sphi 0, %s16
    %p13 = scmp.ge.s32.totalorder %s12, 4
    %s22 = sphi 0, %s24
    %s25 = sphi 0, %s22
    %s26 = sphi 0, %s25
    %s42 = sphi 0, %s26
    %s46 = sphi 0, %s46
    %s48 = sphi 0, %s46
    %s49 = sphi 0, %s48
    %s63 = sphi 0, %s49
    %s67 = sphi 0, %s67
    %s69 = sphi 0, %s67
    %s70 = sphi 0, %s69
    %s84 = sphi 0, %s70
    %s88 = sphi 0, %s88
    %s90 = sphi 0, %s88
    %s91 = sphi 0, %s90
    %s105 = sphi 0, %s91
    %s109 = sphi 0, %s109
    %s111 = sphi 0, %s109
    %s112 = sphi 0, %s111
    %s126 = sphi 0, %s112
    %s132 = sphi 0, %s134
    %s135 = sphi 0, %s132
    %s136 = sphi 0, %s135
    %s152 = sphi 0, %s136
  $region4: #{encoder_forward.5} parent=0 // loop_header_branch
    %15 = sbr.rel (%p13) target = $region8
  $region5: #{encoder_forward.5} parent=0 // loop_body
    %s17 = ssub.s32 %s12, 1
    %s18 = ssub.s32 %s12, 2
    %s19 = sadd.s32 %s12, 1
    %s20 = ssub.s32 %s12, %s19
    %p21 = scmp.eq.s32.totalorder %s20, 0
    %s23 = sadd.s32 %s22, 1
    %s24 = scalar_select %p21, %s22, %s23
    %p27 = pneg %p21
    %p28 = scmp.eq.s32.totalorder %s12, 1
    %p29 = por %p27, %p28
    %p30 = scmp.ne.s32.totalorder %s22, %s25
    %p31 = scmp.eq.s32.totalorder %s12, 0
    %p32 = por %p30, %p31
    %p33 = scmp.ne.s32.totalorder %s22, %s25
    %p34 = scmp.eq.s32.totalorder %s17, 1
    %p35 = por %p33, %p34
    %p36 = scmp.ne.s32.totalorder %s25, %s26
    %p37 = scmp.eq.s32.totalorder %s17, 0
    %p38 = por %p36, %p37
    %p39 = scmp.ne.s32.totalorder %s25, %s26
    %p40 = scmp.eq.s32.totalorder %s18, 1
    %p41 = por %p39, %p40
    %p43 = scmp.ne.s32.totalorder %s26, %s42
    %p44 = scmp.eq.s32.totalorder %s18, 0
    %p45 = por %p43, %p44
    %s47 = sadd.s32 %s46, 1
    %p50 = scmp.eq.s32.totalorder %s12, 1
    %p51 = scmp.ne.s32.totalorder %s46, %s48
    %p52 = scmp.eq.s32.totalorder %s12, 0
    %p53 = por %p51, %p52
    %p54 = scmp.ne.s32.totalorder %s46, %s48
    %p55 = scmp.eq.s32.totalorder %s17, 1
    %p56 = por %p54, %p55
    %p57 = scmp.ne.s32.totalorder %s48, %s49
    %p58 = scmp.eq.s32.totalorder %s17, 0
    %p59 = por %p57, %p58
    %p60 = scmp.ne.s32.totalorder %s48, %s49
    %p61 = scmp.eq.s32.totalorder %s18, 1
    %p62 = por %p60, %p61
    %p64 = scmp.ne.s32.totalorder %s49, %s63
    %p65 = scmp.eq.s32.totalorder %s18, 0
    %p66 = por %p64, %p65
    %s68 = sadd.s32 %s67, 1
    %p71 = scmp.eq.s32.totalorder %s12, 1
    %p72 = scmp.ne.s32.totalorder %s67, %s69
    %p73 = scmp.eq.s32.totalorder %s12, 0
    %p74 = por %p72, %p73
    %p75 = scmp.ne.s32.totalorder %s67, %s69
    %p76 = scmp.eq.s32.totalorder %s17, 1
    %p77 = por %p75, %p76
    %p78 = scmp.ne.s32.totalorder %s69, %s70
    %p79 = scmp.eq.s32.totalorder %s17, 0
    %p80 = por %p78, %p79
    %p81 = scmp.ne.s32.totalorder %s69, %s70
    %p82 = scmp.eq.s32.totalorder %s18, 1
    %p83 = por %p81, %p82
    %p85 = scmp.ne.s32.totalorder %s70, %s84
    %p86 = scmp.eq.s32.totalorder %s18, 0
    %p87 = por %p85, %p86
    %s89 = sadd.s32 %s88, 1
    %p92 = scmp.eq.s32.totalorder %s12, 1
    %p93 = scmp.ne.s32.totalorder %s88, %s90
    %p94 = scmp.eq.s32.totalorder %s12, 0
    %p95 = por %p93, %p94
    %p96 = scmp.ne.s32.totalorder %s88, %s90
    %p97 = scmp.eq.s32.totalorder %s17, 1
    %p98 = por %p96, %p97
    %p99 = scmp.ne.s32.totalorder %s90, %s91
    %p100 = scmp.eq.s32.totalorder %s17, 0
    %p101 = por %p99, %p100
    %p102 = scmp.ne.s32.totalorder %s90, %s91
    %p103 = scmp.eq.s32.totalorder %s18, 1
    %p104 = por %p102, %p103
    %p106 = scmp.ne.s32.totalorder %s91, %s105
    %p107 = scmp.eq.s32.totalorder %s18, 0
    %p108 = por %p106, %p107
    %s110 = sadd.s32 %s109, 1
    %p113 = scmp.eq.s32.totalorder %s12, 1
    %p114 = scmp.ne.s32.totalorder %s109, %s111
    %p115 = scmp.eq.s32.totalorder %s12, 0
    %p116 = por %p114, %p115
    %p117 = scmp.ne.s32.totalorder %s109, %s111
    %p118 = scmp.eq.s32.totalorder %s17, 1
    %p119 = por %p117, %p118
    %p120 = scmp.ne.s32.totalorder %s111, %s112
    %p121 = scmp.eq.s32.totalorder %s17, 0
    %p122 = por %p120, %p121
    %p123 = scmp.ne.s32.totalorder %s111, %s112
    %p124 = scmp.eq.s32.totalorder %s18, 1
    %p125 = por %p123, %p124
    %p127 = scmp.ne.s32.totalorder %s112, %s126
    %p128 = scmp.eq.s32.totalorder %s18, 0
    %p129 = por %p127, %p128
    %s130 = ssub.s32 %s12, %s19
    %p131 = scmp.eq.s32.totalorder %s130, 0
    %s133 = sadd.s32 %s132, 1
    %s134 = scalar_select %p131, %s132, %s133
    %p137 = pneg %p131
    %p138 = scmp.eq.s32.totalorder %s12, 1
    %p139 = por %p137, %p138
    %p140 = scmp.ne.s32.totalorder %s132, %s135
    %p141 = scmp.eq.s32.totalorder %s12, 0
    %p142 = por %p140, %p141
    %p143 = scmp.ne.s32.totalorder %s132, %s135
    %p144 = scmp.eq.s32.totalorder %s17, 1
    %p145 = por %p143, %p144
    %p146 = scmp.ne.s32.totalorder %s135, %s136
    %p147 = scmp.eq.s32.totalorder %s17, 0
    %p148 = por %p146, %p147
    %p149 = scmp.ne.s32.totalorder %s135, %s136
    %p150 = scmp.eq.s32.totalorder %s18, 1
    %p151 = por %p149, %p150
    %p153 = scmp.ne.s32.totalorder %s136, %s152
    %p154 = scmp.eq.s32.totalorder %s18, 0
    %p155 = por %p153, %p154
    %p156 = scmp.le.s32.totalorder 1, %s12
    %p157 = scmp.lt.s32.totalorder %s12, 3
    %p158 = pnand %p156, %p157
    %p159 = pneg %p158
    // Predicated region
    $region9: #{encoder_forward.5} parent=5 // pred_check
      _
    $region10: #{encoder_forward.5} parent=5 // pred_check_branch
      %161 = sbr.rel (%p158) target = $region12
    $region11: #{encoder_forward.5} parent=5 // pred_region
      %s162 = ssub.s32 %s12, 1
      // Predicated region
      $region13: #{encoder_forward.5} parent=11 // pred_check
        %p163 = pneg %p59
      $region14: #{encoder_forward.5} parent=11 // pred_check_branch
        %165 = sbr.rel (%p163) target = $region16
      $region15: #{encoder_forward.5} parent=11 // pred_region
        _
      $region16: #{encoder_forward.5} parent=11 // pred_fallthru
        _
      // Predicated region
      $region17: #{encoder_forward.5} parent=11 // pred_check
        %p166 = pneg %p80
      $region18: #{encoder_forward.5} parent=11 // pred_check_branch
        %168 = sbr.rel (%p166) target = $region20
      $region19: #{encoder_forward.5} parent=11 // pred_region
        _
      $region20: #{encoder_forward.5} parent=11 // pred_fallthru
        _
      // Predicated region
      $region21: #{encoder_forward.5} parent=11 // pred_check
        %p169 = pneg %p101
      $region22: #{encoder_forward.5} parent=11 // pred_check_branch
        %171 = sbr.rel (%p169) target = $region24
      $region23: #{encoder_forward.5} parent=11 // pred_region
        _
      $region24: #{encoder_forward.5} parent=11 // pred_fallthru
        _
      // Predicated region
      $region25: #{encoder_forward.5} parent=11 // pred_check
        %p172 = pneg %p122
      $region26: #{encoder_forward.5} parent=11 // pred_check_branch
        %174 = sbr.rel (%p172) target = $region28
      $region27: #{encoder_forward.5} parent=11 // pred_region
        _
      $region28: #{encoder_forward.5} parent=11 // pred_fallthru
        _
    $region12: #{encoder_forward.5} parent=5 // pred_fallthru
      _
    %p175 = scmp.lt.s32.totalorder %s12, 2
    // Predicated region
    $region29: #{encoder_forward.5} parent=5 // pred_check
      %p176 = pneg %p175
    $region30: #{encoder_forward.5} parent=5 // pred_check_branch
      %178 = sbr.rel (%p176) target = $region32
    $region31: #{encoder_forward.5} parent=5 // pred_region
      // Predicated region
      $region33: #{encoder_forward.5} parent=31 // pred_check
        %p179 = pneg %p32
      $region34: #{encoder_forward.5} parent=31 // pred_check_branch
        %181 = sbr.rel (%p179) target = $region36
      $region35: #{encoder_forward.5} parent=31 // pred_region
        %s182 = smul.u32 2, %s12
        %p183 = scmp.lt.s32.totalorder %s182, 3
        %s184 = scalar_select %p183, %s182, 3
        %s185 = smul.addr %s184, 4
        %s186 = scalar_lea.vmem %s0, %s185
        %s187 = smul.u32 2, %s12
      $region36: #{encoder_forward.5} parent=31 // pred_fallthru
        _
    $region32: #{encoder_forward.5} parent=5 // pred_fallthru
      _
    %p188 = scmp.le.s32.totalorder 1, %s12
    %p189 = scmp.lt.s32.totalorder %s12, 3
    %p190 = pnand %p188, %p189
    %p191 = pneg %p190
    // Predicated region
    $region37: #{encoder_forward.5} parent=5 // pred_check
      _
    $region38: #{encoder_forward.5} parent=5 // pred_check_branch
      %193 = sbr.rel (%p190) target = $region40
    $region39: #{encoder_forward.5} parent=5 // pred_region
      %s194 = ssub.s32 %s12, 1
      %s195 = smul.u32 2, %s17
      %p196 = scmp.lt.s32.totalorder %s195, 3
      %s197 = scalar_select %p196, %s195, 3
      %s198 = smul.addr %s197, 4
      %s199 = scalar_lea.vmem %s0, %s198
      %p200 = pneg %p38
      %p201 = pneg %p35
      %p202 = pneg %p59
      %p203 = pneg %p56
      %p204 = pneg %p80
      %p205 = pneg %p77
      %p206 = pneg %p101
      %p207 = pneg %p98
      %p208 = pneg %p122
      %p209 = pneg %p119
      %p210 = pneg %p148
      %p211 = pneg %p145
      %s212 = smul.u32 2, %s17
      %p213 = scmp.lt.s32.totalorder %s212, 3
      %s214 = scalar_select %p213, %s212, 3
      %s215 = smul.addr %s214, 8
      %s216 = scalar_lea.vmem %s5, %s215
      %s217 = smul.u32 2, %s17
      %p218 = scmp.lt.s32.totalorder %s217, 3
      %s219 = scalar_select %p218, %s217, 3
      %s220 = smul.addr %s219, 4
      %s221 = scalar_lea.vmem %s0, %s220
      %s222 = smul.u32 2, %s17
      %s223 = smul.u32 2, %s17
      %p224 = scmp.lt.s32.totalorder %s223, 3
      %s225 = scalar_select %p224, %s223, 3
      %s226 = smul.addr %s225, 8
      %s227 = scalar_lea.vmem %s5, %s226
      %s228 = smul.u32 2, %s17
      %v230 = vld [vmem:[%s221] sm:$0xf]
      %v231 = vld [vmem:[%s221 + $0x4] sm:$0xf]
      %v232 = vld [vmem:[%s1] sm:$0xf]
      %v233 = vld [vmem:[%s1 + $0x4] sm:$0xf]
      %v234 = vld [vmem:[%s1 + $0x8] sm:$0xf]
      %v235 = vld [vmem:[%s1 + $0xc] sm:$0xf]
      %v236 = vld [vmem:[%s1 + $0x10] sm:$0xf]
      %v237 = vld [vmem:[%s1 + $0x14] sm:$0xf]
      %v238 = vld [vmem:[%s1 + $0x18] sm:$0xf]
      %v239 = vld [vmem:[%s1 + $0x1c] sm:$0xf]
      %v240 = vld [vmem:[%s1 + $0x20] sm:$0xf]
      %v243 = vunpack.c.l.b16 %v230
      %v244 = vunpack.c.l.b16 %v231
      %v245 = vpack.c.b16 %v244, %v243
      %v255 = vunpack.c.l.b16 %v232
      %v256 = vunpack.c.l.b16 %v233
      %v257 = vunpack.c.l.b16 %v234
      %v258 = vunpack.c.l.b16 %v235
      %v259 = vunpack.c.l.b16 %v236
      %v260 = vunpack.c.l.b16 %v237
      %v261 = vunpack.c.l.b16 %v238
      %v262 = vunpack.c.l.b16 %v239
      %v263 = vunpack.c.l.b16 %v240
      %v264 = vpack.c.b16 %v256, %v255
      %v265 = vpack.c.b16 %v258, %v257
      %v266 = vpack.c.b16 %v260, %v259
      %v267 = vpack.c.b16 %v262, %v261
      %v268 = vpack.c.b16 %v263, %v263
      %vm273 = vcmask 588800
      %v275 = vsel %vm273, %v245, 0
      %vm277 = vcmask 1043456
      %v279 = vsel %vm277, %v268, 0
      %281 = vmatpush.bf16.msra.mxu0 0
      %282 = vmatpush.bf16.msra.mxu0 0
      %283 = vmatpush.bf16.msra.mxu0 0
      %284 = vmatpush.bf16.msra.mxu0 %v279
      %285 = vmatpush.bf16.msra.mxu0 %v267
      %286 = vmatpush.bf16.msra.mxu0 %v266
      %287 = vmatpush.bf16.msra.mxu0 %v265
      %288 = vmatpush.bf16.msra.mxu0 %v264
      %289 = vmatmul.bf16.gmra.mxu0 %v275
      %v290 = vpop.f32.mrf.mxu0
      %v291 = vadd.f32 0.0, %v290
      %v292 = vpop.f32.mrf.mxu0
      %v293 = vadd.f32 0.0, %v292
      %294 = vdwg.mxu0
      %v295 = vmul.f32 %v291, %v291
      %v296 = vmul.f32 %v293, %v293
      %v297 = vpack.c.bf16 %v296, %v295
      %v298 = vld [vmem:[%s2] sm:$0x3]
      %v299 = vld [vmem:[%s3] sm:$0x1]
      %v301 = vperm.slane %v299, 0
      %vm303 = vcmask 31744
      %v305 = vsel %vm303, %v297, 0
      %vm307 = vcmask 1041408
      %v309 = vsel %vm307, %v298, 0
      %311 = vmatpush.bf16.msra.mxu0 0
      %312 = vmatpush.bf16.msra.mxu0 0
      %313 = vmatpush.bf16.msra.mxu0 0
      %314 = vmatpush.bf16.msra.mxu0 0
      %315 = vmatpush.bf16.msra.mxu0 0
      %316 = vmatpush.bf16.msra.mxu0 0
      %317 = vmatpush.bf16.msra.mxu0 0
      %318 = vmatpush.bf16.msra.mxu0 %v309
      %319 = vmatmul.bf16.gmra.mxu0 %v305
      %v320 = vpop.f32.mrf.mxu0
      %v321 = vadd.f32 %v301, %v320
      %v322 = vpop.f32.mrf.mxu0
      %v323 = vadd.f32 %v301, %v322
      %324 = vdwg.mxu0
      %v325 = vrsqrt.pop %v321
      %v326 = vmul.f32 %v325, %v321
      %v327 = vmul.f32 %v326, %v325
      %v328 = vmul.f32 0.5, %v327
      %v329 = vsub.f32 1.5, %v328
      %v330 = vmul.f32 %v325, %v329
      %vm331 = vweird.f32 %v321
      %vm332 = vweird.f32 %v325
      %vm333 = vmor %vm331, %vm332
      %v334 = vsel %vm333, %v325, %v330
      %v335 = vrsqrt.pop %v323
      %v336 = vmul.f32 %v335, %v323
      %v337 = vmul.f32 %v336, %v335
      %v338 = vmul.f32 0.5, %v337
      %v339 = vsub.f32 1.5, %v338
      %v340 = vmul.f32 %v335, %v339
      %vm341 = vweird.f32 %v323
      %vm342 = vweird.f32 %v335
      %vm343 = vmor %vm341, %vm342
      %v344 = vsel %vm343, %v335, %v340
      %v345 = vmul.f32 %v291, %v334
      %v346 = vmul.f32 %v293, %v344
      %s347 = sld [smem:[#allocation2]]
      %vm348 = vcmp.ge.f32.partialorder %v345, 0.0
      %vm349 = vcmp.ge.f32.partialorder %v346, 0.0
      %v350 = vstv %s347
      %v351 = vmul.f32 %v350, %v345
      %v352 = vmul.f32 %v350, %v346
      %v353 = vsel %vm348, %v345, %v351
      %v354 = vsel %vm349, %v346, %v352
      %355 = vst.msk [vmem:[%s227] sm:$0xff] %vm303, %v353
      %356 = vst.msk [vmem:[%s227 + $0x8] sm:$0xff] %vm303, %v354
      %s357 = smul.u32 2, %s17
      %p358 = scmp.lt.s32.totalorder %s357, 3
      %s359 = scalar_select %p358, %s357, 3
      %s360 = smul.addr %s359, 8
      %s361 = scalar_lea.vmem %s5, %s360
      // Predicated region
      $region41: #{encoder_forward.5} parent=39 // pred_check
        %p362 = pneg %p145
      $region42: #{encoder_forward.5} parent=39 // pred_check_branch
        %364 = sbr.rel (%p362) target = $region44
      $region43: #{encoder_forward.5} parent=39 // pred_region
        %s365 = smul.u32 2, %s17
      $region44: #{encoder_forward.5} parent=39 // pred_fallthru
        _
    $region40: #{encoder_forward.5} parent=5 // pred_fallthru
      _
    %p366 = scmp.le.s32.totalorder 2, %s12
    // Predicated region
    $region45: #{encoder_forward.5} parent=5 // pred_check
      %p367 = pneg %p366
    $region46: #{encoder_forward.5} parent=5 // pred_check_branch
      %369 = sbr.rel (%p367) target = $region48
    $region47: #{encoder_forward.5} parent=5 // pred_region
      %s370 = ssub.s32 %s12, 2
      // Predicated region
      $region49: #{encoder_forward.5} parent=47 // pred_check
        %p371 = pneg %p151
      $region50: #{encoder_forward.5} parent=47 // pred_check_branch
        %373 = sbr.rel (%p371) target = $region52
      $region51: #{encoder_forward.5} parent=47 // pred_region
        %s374 = smul.u32 2, %s18
        %p375 = scmp.lt.s32.totalorder %s374, 3
        %s376 = scalar_select %p375, %s374, 3
        %s377 = smul.addr %s376, 8
        %s378 = scalar_lea.vmem %s5, %s377
      $region52: #{encoder_forward.5} parent=47 // pred_fallthru
        _
    $region48: #{encoder_forward.5} parent=5 // pred_fallthru
      _
  $region6: #{encoder_forward.5} parent=0 // loop_footer
    %s16 = sadd.s32 1, %s12
  $region7: #{encoder_forward.5} parent=0 // loop_footer_branch
    %11 = sbr.rel target = $region3
  $region8: #{encoder_forward.5} parent=0 // loop_exit
    _

</llo_original>
